<compile_context>
chip_gen: v7x
topology: tpu7x:2x2x1
jax: 0.10.0
libtpu: 0.0.40
codegen_flags: <defaults>
</compile_context>

<pallas_src>
import functools

import jax
import jax.numpy as jnp
from jax.experimental import pallas as pl
from jax.experimental.pallas import tpu as pltpu

SOS_TOKEN = 0
MAX_DECODE_LEN = 6
LANE = 128


def _round_up(x, m=LANE):
    return ((x + m - 1) // m) * m


# ---------------------------------------------------------------------------
# In-kernel GRU cell (single fused matmul, lane-aligned gate slices)
# ---------------------------------------------------------------------------
def _gru_cell(x, h, w_cat, b_cat, hp):
    """x:(B,EP) f32, h:(B,HP) f32, w_cat:(EP+HP,4*HP) bf16, b_cat:(1,4*HP) f32.

    Column layout of w_cat/b_cat (each slot HP wide, lane-aligned):
      [0:HP)      r-gate  (x@W_ir + h@W_hr, bias b_ir+b_hr)
      [HP:2HP)    z-gate  (x@W_iz + h@W_hz, bias b_iz+b_hz)
      [2HP:3HP)   i_n     (x@W_in, bias b_in)
      [3HP:4HP)   h_n     (h@W_hn, bias b_hn)
    """
    xh = jnp.concatenate([x, h], axis=-1).astype(jnp.bfloat16)
    g = jnp.dot(xh, w_cat, preferred_element_type=jnp.float32) + b_cat
    r = jax.nn.sigmoid(g[:, 0:hp])
    z = jax.nn.sigmoid(g[:, hp:2 * hp])
    n = jnp.tanh(g[:, 2 * hp:3 * hp] + r * g[:, 3 * hp:4 * hp])
    return (1.0 - z) * n + z * h


# ---------------------------------------------------------------------------
# Fused encoder kernel: grid=(T,), hidden carried in VMEM scratch,
# last-valid hidden (pack_padded semantics) selected online.
# ---------------------------------------------------------------------------
def _encoder_kernel(x_ref, lastidx_ref, w_ref, b_ref, hout_ref, h_scratch):
    t = pl.program_id(0)

    @pl.when(t == 0)
    def _():
        h_scratch[...] = jnp.zeros_like(h_scratch)
        hout_ref[...] = jnp.zeros_like(hout_ref)

    hp = h_scratch.shape[1]
    h_new = _gru_cell(x_ref[0], h_scratch[...], w_ref[...], b_ref[...], hp)
    h_scratch[...] = h_new

    sel = lastidx_ref[...] == t                      # (B, 1) bool
    hout_ref[...] = jnp.where(sel, h_new, hout_ref[...])


def _run_encoder(x_emb, last_idx, w_cat, b_cat):
    T, B, EP = x_emb.shape
    HP = w_cat.shape[1] // 4
    return pl.pallas_call(
        _encoder_kernel,
        out_shape=jax.ShapeDtypeStruct((B, HP), jnp.float32),
        grid_spec=pltpu.PrefetchScalarGridSpec(
            num_scalar_prefetch=0,
            grid=(T,),
            in_specs=[
                pl.BlockSpec((1, B, EP), lambda t: (t, 0, 0)),   # per-step input
                pl.BlockSpec((B, 1), lambda t: (0, 0)),          # last-valid index
                pl.BlockSpec(w_cat.shape, lambda t: (0, 0)),     # resident weights
                pl.BlockSpec(b_cat.shape, lambda t: (0, 0)),
            ],
            out_specs=pl.BlockSpec((B, HP), lambda t: (0, 0)),   # resident output
            scratch_shapes=[pltpu.VMEM((B, HP), jnp.float32)],
        ),
        compiler_params=pltpu.CompilerParams(dimension_semantics=("arbitrary",)),
    )(x_emb, last_idx, w_cat, b_cat)


# ---------------------------------------------------------------------------
# Fused decoder kernel: grid=(L,), greedy decode fully in-kernel.
# Token feedback is kept as a one-hot (B, VP) in VMEM; embedding lookup is a
# one-hot @ embedding matmul on the MXU.
# ---------------------------------------------------------------------------
def _decoder_kernel(h0_ref, emb_ref, w_ref, b_ref, fcw_ref, fcb_ref,
                    out_ref, h_scratch, tok_scratch):
    s = pl.program_id(0)
    B, HP = h_scratch.shape
    VP = tok_scratch.shape[1]

    @pl.when(s == 0)
    def _():
        h_scratch[...] = h0_ref[...]
        idx0 = jax.lax.broadcasted_iota(jnp.int32, (B, VP), 1)
        tok_scratch[...] = (idx0 == SOS_TOKEN).astype(jnp.float32)

    # embedding lookup via one-hot matmul (exact)
    x = jnp.dot(tok_scratch[...].astype(jnp.bfloat16), emb_ref[...],
                preferred_element_type=jnp.float32)              # (B, EP)

    h_new = _gru_cell(x, h_scratch[...], w_ref[...], b_ref[...], HP)
    h_scratch[...] = h_new

    # projection + log_softmax (padded vocab cols have bias -1e30 -> ~0 prob)
    logits = jnp.dot(h_new.astype(jnp.bfloat16), fcw_ref[...],
                     preferred_element_type=jnp.float32) + fcb_ref[...]
    m = jnp.max(logits, axis=-1, keepdims=True)
    shifted = logits - m
    lse = jnp.log(jnp.sum(jnp.exp(shifted), axis=-1, keepdims=True))
    logp = shifted - lse
    out_ref[0] = logp

    # greedy argmax -> one-hot for next step (ties broken to lowest index)
    idx = jax.lax.broadcasted_iota(jnp.int32, (B, VP), 1)
    mx = jnp.max(logp, axis=-1, keepdims=True)
    amax = jnp.min(jnp.where(logp == mx, idx, VP), axis=-1, keepdims=True)
    tok_scratch[...] = (idx == amax).astype(jnp.float32)


def _run_decoder(h0, emb, w_cat, b_cat, fc_w, fc_b, L):
    B, HP = h0.shape
    VP = fc_w.shape[1]
    return pl.pallas_call(
        _decoder_kernel,
        out_shape=jax.ShapeDtypeStruct((L, B, VP), jnp.float32),
        grid_spec=pltpu.PrefetchScalarGridSpec(
            num_scalar_prefetch=0,
            grid=(L,),
            in_specs=[
                pl.BlockSpec((B, HP), lambda s: (0, 0)),         # encoder hidden
                pl.BlockSpec(emb.shape, lambda s: (0, 0)),       # resident dec_emb
                pl.BlockSpec(w_cat.shape, lambda s: (0, 0)),     # resident GRU W
                pl.BlockSpec(b_cat.shape, lambda s: (0, 0)),
                pl.BlockSpec(fc_w.shape, lambda s: (0, 0)),      # resident fc W
                pl.BlockSpec(fc_b.shape, lambda s: (0, 0)),
            ],
            out_specs=pl.BlockSpec((1, B, VP), lambda s: (s, 0, 0)),
            scratch_shapes=[pltpu.VMEM((B, HP), jnp.float32),    # dec hidden
                            pltpu.VMEM((B, VP), jnp.float32)],   # one-hot token
        ),
        compiler_params=pltpu.CompilerParams(dimension_semantics=("arbitrary",)),
    )(h0, emb, w_cat, b_cat, fc_w, fc_b)


# ---------------------------------------------------------------------------
# Parameter init (raw PyTorch-like shapes) and kernel-layout preparation
# ---------------------------------------------------------------------------
def init_params(key, vocab_in, vocab_out, emb_dim, hidden):
    ks = jax.random.split(key, 12)
    bound = 1.0 / jnp.sqrt(hidden)

    def u(k, shape):
        return jax.random.uniform(k, shape, jnp.float32, -bound, bound)

    return {
        "enc_emb": jax.random.normal(ks[0], (vocab_in, emb_dim), jnp.float32) * 0.1,
        "enc_w_ih_t": u(ks[1], (emb_dim, 3 * hidden)),
        "enc_w_hh_t": u(ks[2], (hidden, 3 * hidden)),
        "enc_b_ih": u(ks[3], (1, 3 * hidden)),
        "enc_b_hh": u(ks[4], (1, 3 * hidden)),
        "dec_emb": jax.random.normal(ks[5], (vocab_out, emb_dim), jnp.float32) * 0.1,
        "dec_w_ih_t": u(ks[6], (emb_dim, 3 * hidden)),
        "dec_w_hh_t": u(ks[7], (hidden, 3 * hidden)),
        "dec_b_ih": u(ks[8], (1, 3 * hidden)),
        "dec_b_hh": u(ks[9], (1, 3 * hidden)),
        "dec_fc_w_t": u(ks[10], (hidden, vocab_out)),
        "dec_fc_b": u(ks[11], (1, vocab_out)),
    }


def prepare_params(raw, emb_dim, hidden, vocab_out):
    """Fuse GRU weights into one block-structured matrix and pad to lane widths."""
    E, H = emb_dim, hidden
    EP, HP, VP = _round_up(E), _round_up(H), _round_up(vocab_out)

    def fuse(w_ih_t, w_hh_t, b_ih, b_hh):
        W = jnp.zeros((EP + HP, 4 * HP), jnp.float32)
        # r gate: x-part rows [0,E), h-part rows [EP, EP+H)
        W = W.at[:E, 0:H].set(w_ih_t[:, 0:H])
        W = W.at[EP:EP + H, 0:H].set(w_hh_t[:, 0:H])
        # z gate
        W = W.at[:E, HP:HP + H].set(w_ih_t[:, H:2 * H])
        W = W.at[EP:EP + H, HP:HP + H].set(w_hh_t[:, H:2 * H])
        # i_n (x only)
        W = W.at[:E, 2 * HP:2 * HP + H].set(w_ih_t[:, 2 * H:3 * H])
        # h_n (h only)
        W = W.at[EP:EP + H, 3 * HP:3 * HP + H].set(w_hh_t[:, 2 * H:3 * H])

        b = jnp.zeros((1, 4 * HP), jnp.float32)
        b = b.at[:, 0:H].set(b_ih[:, 0:H] + b_hh[:, 0:H])
        b = b.at[:, HP:HP + H].set(b_ih[:, H:2 * H] + b_hh[:, H:2 * H])
        b = b.at[:, 2 * HP:2 * HP + H].set(b_ih[:, 2 * H:3 * H])
        b = b.at[:, 3 * HP:3 * HP + H].set(b_hh[:, 2 * H:3 * H])
        return W.astype(jnp.bfloat16), b

    enc_w, enc_b = fuse(raw["enc_w_ih_t"], raw["enc_w_hh_t"],
                        raw["enc_b_ih"], raw["enc_b_hh"])
    dec_w, dec_b = fuse(raw["dec_w_ih_t"], raw["dec_w_hh_t"],
                        raw["dec_b_ih"], raw["dec_b_hh"])

    enc_emb = jnp.zeros((raw["enc_emb"].shape[0], EP), jnp.float32)
    enc_emb = enc_emb.at[:, :E].set(raw["enc_emb"])

    dec_emb = jnp.zeros((VP, EP), jnp.bfloat16)
    dec_emb = dec_emb.at[:vocab_out, :E].set(raw["dec_emb"].astype(jnp.bfloat16))

    fc_w = jnp.zeros((HP, VP), jnp.bfloat16)
    fc_w = fc_w.at[:H, :vocab_out].set(raw["dec_fc_w_t"].astype(jnp.bfloat16))
    # padded vocab columns get -1e30 bias so they never win softmax / argmax
    fc_b = jnp.full((1, VP), -1e30, jnp.float32)
    fc_b = fc_b.at[:, :vocab_out].set(raw["dec_fc_b"])

    return {"enc_emb": enc_emb, "enc_w": enc_w, "enc_b": enc_b,
            "dec_emb": dec_emb, "dec_w": dec_w, "dec_b": dec_b,
            "dec_fc_w": fc_w, "dec_fc_b": fc_b}


# ---------------------------------------------------------------------------
# Seq2Seq forward
# ---------------------------------------------------------------------------
@functools.partial(jax.jit, static_argnames=("max_decode_len", "v_out"))
def seq2seq_forward(kp, tokens, input_len, max_decode_len=MAX_DECODE_LEN,
                    v_out=16):
    """tokens: (B, T) int32; input_len: (B,) int32.
    Returns decoder_outputs: (B, max_decode_len, v_out) log-probabilities."""
    B, T = tokens.shape

    # encoder embedding lookup (gather) in plain JAX, then (T, B, EP) layout
    x_emb = jnp.take(kp["enc_emb"], tokens, axis=0)          # (B, T, EP)
    x_emb = jnp.transpose(x_emb, (1, 0, 2))                  # (T, B, EP)
    last_idx = jnp.clip(input_len - 1, 0, T - 1).astype(jnp.int32).reshape(B, 1)

    # fused encoder: pack_padded semantics -> hidden at step len-1
    enc_hidden = _run_encoder(x_emb, last_idx, kp["enc_w"], kp["enc_b"])

    # fused greedy decoder
    dec_out = _run_decoder(enc_hidden, kp["dec_emb"], kp["dec_w"], kp["dec_b"],
                           kp["dec_fc_w"], kp["dec_fc_b"], max_decode_len)
    dec_out = jnp.transpose(dec_out, (1, 0, 2))              # (B, L, VP)
    return dec_out[:, :, :v_out]


# ---------------------------------------------------------------------------
if __name__ == "__main__":
    B, T = 2, 8
    EMB, HID = 32, 32
    V_IN, V_OUT = 16, 16

    key = jax.random.PRNGKey(0)
    k_par, k_tok = jax.random.split(key)
    raw_params = init_params(k_par, V_IN, V_OUT, EMB, HID)
    kparams = prepare_params(raw_params, EMB, HID, V_OUT)

    tokens = jax.random.randint(k_tok, (B, T), 1, V_IN, dtype=jnp.int32)
    input_len = jnp.array([T, 5], dtype=jnp.int32)
    mask = jnp.arange(T)[None, :] < input_len[:, None]
    tokens = jnp.where(mask, tokens, 0)

    out = seq2seq_forward(kparams, tokens, input_len,
                          max_decode_len=MAX_DECODE_LEN, v_out=V_OUT)
    jax.block_until_ready(out)
    assert out.shape == (B, MAX_DECODE_LEN, V_OUT)
    # log_softmax rows should sum to ~1 in prob space
    assert jnp.allclose(jnp.sum(jnp.exp(out), axis=-1), 1.0, atol=1e-4)
    print("KERNEL_OK")
</pallas_src>

<mosaic_0001>
module attributes {stable_mosaic.version = 11 : i64} {
  func.func @_decoder_kernel(%arg0: i32, %arg1: memref<2x128xf32, #tpu.memory_space<vmem>>, %arg2: memref<128x128xbf16, #tpu.memory_space<vmem>>, %arg3: memref<256x512xbf16, #tpu.memory_space<vmem>>, %arg4: memref<1x512xf32, #tpu.memory_space<vmem>>, %arg5: memref<128x128xbf16, #tpu.memory_space<vmem>>, %arg6: memref<1x128xf32, #tpu.memory_space<vmem>>, %arg7: memref<1x2x128xf32, #tpu.memory_space<vmem>>, %arg8: memref<2x128xf32, #tpu.memory_space<vmem>>, %arg9: memref<2x128xf32, #tpu.memory_space<vmem>>) attributes {dimension_semantics = [#tpu.dimension_semantics<arbitrary>], iteration_bounds = array<i64: 6>, scalar_prefetch = 0 : i64, scratch_operands = 2 : i64, tpu.core_type = #tpu.core_type<tc>, window_params = [{pipeline_mode = #tpu.pipeline_mode<synchronous>, transform_indices = @transform_0, window_bounds = array<i64: 2, 128>}, {pipeline_mode = #tpu.pipeline_mode<synchronous>, transform_indices = @transform_1, window_bounds = array<i64: 128, 128>}, {pipeline_mode = #tpu.pipeline_mode<synchronous>, transform_indices = @transform_2, window_bounds = array<i64: 256, 512>}, {pipeline_mode = #tpu.pipeline_mode<synchronous>, transform_indices = @transform_3, window_bounds = array<i64: 1, 512>}, {pipeline_mode = #tpu.pipeline_mode<synchronous>, transform_indices = @transform_4, window_bounds = array<i64: 128, 128>}, {pipeline_mode = #tpu.pipeline_mode<synchronous>, transform_indices = @transform_5, window_bounds = array<i64: 1, 128>}, {transform_indices = @transform_6, window_bounds = array<i64: 1, 2, 128>}]} {
    %c0_i32 = arith.constant 0 : i32
    %0 = arith.cmpi eq, %arg0, %c0_i32 : i32
    %1 = arith.extui %0 : i1 to i32
    %c0_i32_0 = arith.constant 0 : i32
    %2 = arith.cmpi ne, %1, %c0_i32_0 : i32
    scf.if %2 {
      %c0_30 = arith.constant 0 : index
      %c0_31 = arith.constant 0 : index
      %71 = vector.load %arg1[%c0_30, %c0_31] : memref<2x128xf32, #tpu.memory_space<vmem>>, vector<2x128xf32>
      %c0_32 = arith.constant 0 : index
      %c0_33 = arith.constant 0 : index
      %72 = vector.load %arg8[%c0_32, %c0_33] : memref<2x128xf32, #tpu.memory_space<vmem>>, vector<2x128xf32>
      tpu.vector_store %arg8[%c0_32, %c0_33], %71 {strides = array<i32>} : memref<2x128xf32, #tpu.memory_space<vmem>>, vector<2x128xf32>,
      %73 = tpu.iota {dimensions = array<i32: 1>} : vector<2x128xi32>
      %c0_i32_34 = arith.constant 0 : i32
      %74 = vector.broadcast %c0_i32_34 : i32 to vector<2x128xi32>
      %75 = arith.cmpi eq, %73, %74 : vector<2x128xi32>
      %76 = arith.extui %75 : vector<2x128xi1> to vector<2x128xi32>
      %77 = arith.sitofp %76 : vector<2x128xi32> to vector<2x128xf32>
      %c0_35 = arith.constant 0 : index
      %c0_36 = arith.constant 0 : index
      %78 = vector.load %arg9[%c0_35, %c0_36] : memref<2x128xf32, #tpu.memory_space<vmem>>, vector<2x128xf32>
      tpu.vector_store %arg9[%c0_35, %c0_36], %77 {strides = array<i32>} : memref<2x128xf32, #tpu.memory_space<vmem>>, vector<2x128xf32>,
    } else {
    }
    %c0 = arith.constant 0 : index
    %c0_1 = arith.constant 0 : index
    %3 = vector.load %arg9[%c0, %c0_1] : memref<2x128xf32, #tpu.memory_space<vmem>>, vector<2x128xf32>
    %4 = arith.truncf %3 : vector<2x128xf32> to vector<2x128xbf16>
    %c0_2 = arith.constant 0 : index
    %c0_3 = arith.constant 0 : index
    %5 = vector.load %arg2[%c0_2, %c0_3] : memref<128x128xbf16, #tpu.memory_space<vmem>>, vector<128x128xbf16>
    %cst = arith.constant dense<0.000000e+00> : vector<2x128xf32>
    %6 = tpu.matmul %4, %5, %cst {dimension_numbers = #tpu.dot_dimension_numbers<[1], [0], [0], [1], [0, 0, 1, 1], [], []>} : vector<2x128xbf16>, vector<128x128xbf16>, vector<2x128xf32> -> vector<2x128xf32>
    %c0_4 = arith.constant 0 : index
    %c0_5 = arith.constant 0 : index
    %7 = vector.load %arg8[%c0_4, %c0_5] : memref<2x128xf32, #tpu.memory_space<vmem>>, vector<2x128xf32>
    %c0_6 = arith.constant 0 : index
    %c0_7 = arith.constant 0 : index
    %8 = vector.load %arg3[%c0_6, %c0_7] : memref<256x512xbf16, #tpu.memory_space<vmem>>, vector<256x512xbf16>
    %c0_8 = arith.constant 0 : index
    %c0_9 = arith.constant 0 : index
    %9 = vector.load %arg4[%c0_8, %c0_9] : memref<1x512xf32, #tpu.memory_space<vmem>>, vector<1x512xf32>
    %10 = tpu.concatenate %6, %7 in 1 : vector<2x128xf32>, vector<2x128xf32> -> vector<2x256xf32>
    %11 = arith.truncf %10 : vector<2x256xf32> to vector<2x256xbf16>
    %cst_10 = arith.constant dense<0.000000e+00> : vector<2x512xf32>
    %12 = tpu.matmul %11, %8, %cst_10 {dimension_numbers = #tpu.dot_dimension_numbers<[1], [0], [0], [1], [0, 0, 1, 1], [], []>} : vector<2x256xbf16>, vector<256x512xbf16>, vector<2x512xf32> -> vector<2x512xf32>
    %13 = vector.broadcast %9 : vector<1x512xf32> to vector<2x512xf32>
    %14 = arith.addf %12, %13 : vector<2x512xf32>
    %15 = vector.extract_strided_slice %14 {offsets = [0, 0], sizes = [2, 128], strides = [1, 1]} : vector<2x512xf32> to vector<2x128xf32>
    %16 = arith.negf %15 : vector<2x128xf32>
    %17 = math.exp %16 : vector<2x128xf32>
    %cst_11 = arith.constant 1.000000e+00 : f32
    %18 = vector.broadcast %cst_11 : f32 to vector<2x128xf32>
    %19 = arith.addf %18, %17 : vector<2x128xf32>
    %20 = arith.divf %18, %19 : vector<2x128xf32>
    %21 = vector.extract_strided_slice %14 {offsets = [0, 128], sizes = [2, 128], strides = [1, 1]} : vector<2x512xf32> to vector<2x128xf32>
    %22 = arith.negf %21 : vector<2x128xf32>
    %23 = math.exp %22 : vector<2x128xf32>
    %cst_12 = arith.constant 1.000000e+00 : f32
    %24 = vector.broadcast %cst_12 : f32 to vector<2x128xf32>
    %25 = arith.addf %24, %23 : vector<2x128xf32>
    %26 = arith.divf %24, %25 : vector<2x128xf32>
    %27 = vector.extract_strided_slice %14 {offsets = [0, 256], sizes = [2, 128], strides = [1, 1]} : vector<2x512xf32> to vector<2x128xf32>
    %28 = vector.extract_strided_slice %14 {offsets = [0, 384], sizes = [2, 128], strides = [1, 1]} : vector<2x512xf32> to vector<2x128xf32>
    %29 = arith.mulf %20, %28 : vector<2x128xf32>
    %30 = arith.addf %27, %29 : vector<2x128xf32>
    %31 = math.tanh %30 : vector<2x128xf32>
    %cst_13 = arith.constant 1.000000e+00 : f32
    %32 = vector.broadcast %cst_13 : f32 to vector<2x128xf32>
    %33 = arith.subf %32, %26 : vector<2x128xf32>
    %34 = arith.mulf %33, %31 : vector<2x128xf32>
    %35 = arith.mulf %26, %7 : vector<2x128xf32>
    %36 = arith.addf %34, %35 : vector<2x128xf32>
    %c0_14 = arith.constant 0 : index
    %c0_15 = arith.constant 0 : index
    %37 = vector.load %arg8[%c0_14, %c0_15] : memref<2x128xf32, #tpu.memory_space<vmem>>, vector<2x128xf32>
    tpu.vector_store %arg8[%c0_14, %c0_15], %36 {strides = array<i32>} : memref<2x128xf32, #tpu.memory_space<vmem>>, vector<2x128xf32>,
    %38 = arith.truncf %36 : vector<2x128xf32> to vector<2x128xbf16>
    %c0_16 = arith.constant 0 : index
    %c0_17 = arith.constant 0 : index
    %39 = vector.load %arg5[%c0_16, %c0_17] : memref<128x128xbf16, #tpu.memory_space<vmem>>, vector<128x128xbf16>
    %cst_18 = arith.constant dense<0.000000e+00> : vector<2x128xf32>
    %40 = tpu.matmul %38, %39, %cst_18 {dimension_numbers = #tpu.dot_dimension_numbers<[1], [0], [0], [1], [0, 0, 1, 1], [], []>} : vector<2x128xbf16>, vector<128x128xbf16>, vector<2x128xf32> -> vector<2x128xf32>
    %c0_19 = arith.constant 0 : index
    %c0_20 = arith.constant 0 : index
    %41 = vector.load %arg6[%c0_19, %c0_20] : memref<1x128xf32, #tpu.memory_space<vmem>>, vector<1x128xf32>
    %42 = vector.broadcast %41 : vector<1x128xf32> to vector<2x128xf32>
    %43 = arith.addf %40, %42 : vector<2x128xf32>
    %cst_21 = arith.constant dense<0xFF800000> : vector<2xf32>
    %44 = vector.multi_reduction <maximumf>, %43, %cst_21 [1] : vector<2x128xf32> to vector<2xf32>
    %45 = vector.shape_cast %44 : vector<2xf32> to vector<2x1xf32>
    %46 = vector.broadcast %45 : vector<2x1xf32> to vector<2x128xf32>
    %47 = arith.subf %43, %46 : vector<2x128xf32>
    %48 = math.exp %47 : vector<2x128xf32>
    %cst_22 = arith.constant dense<0.000000e+00> : vector<2xf32>
    %49 = vector.multi_reduction <add>, %48, %cst_22 [1] : vector<2x128xf32> to vector<2xf32>
    %50 = vector.shape_cast %49 : vector<2xf32> to vector<2x1xf32>
    %51 = math.log %50 : vector<2x1xf32>
    %52 = vector.broadcast %51 : vector<2x1xf32> to vector<2x128xf32>
    %53 = arith.subf %47, %52 : vector<2x128xf32>
    %c0_23 = arith.constant 0 : index
    %c0_24 = arith.constant 0 : index
    %c0_25 = arith.constant 0 : index
    %54 = vector.load %arg7[%c0_23, %c0_24, %c0_25] : memref<1x2x128xf32, #tpu.memory_space<vmem>>, vector<1x2x128xf32>
    %55 = vector.shape_cast %54 : vector<1x2x128xf32> to vector<2x128xf32>
    %56 = vector.shape_cast %53 : vector<2x128xf32> to vector<1x2x128xf32>
    tpu.vector_store %arg7[%c0_23, %c0_24, %c0_25], %56 {strides = array<i32>} : memref<1x2x128xf32, #tpu.memory_space<vmem>>, vector<1x2x128xf32>,
    %57 = tpu.iota {dimensions = array<i32: 1>} : vector<2x128xi32>
    %cst_26 = arith.constant dense<0xFF800000> : vector<2xf32>
    %58 = vector.multi_reduction <maximumf>, %53, %cst_26 [1] : vector<2x128xf32> to vector<2xf32>
    %59 = vector.shape_cast %58 : vector<2xf32> to vector<2x1xf32>
    %60 = vector.broadcast %59 : vector<2x1xf32> to vector<2x128xf32>
    %61 = arith.cmpf oeq, %53, %60 : vector<2x128xf32>
    %c128_i32 = arith.constant 128 : i32
    %62 = vector.broadcast %c128_i32 : i32 to vector<2x128xi32>
    %63 = arith.select %61, %57, %62 : vector<2x128xi1>, vector<2x128xi32>
    %cst_27 = arith.constant dense<2147483647> : vector<2xi32>
    %64 = vector.multi_reduction <minsi>, %63, %cst_27 [1] : vector<2x128xi32> to vector<2xi32>
    %65 = vector.shape_cast %64 : vector<2xi32> to vector<2x1xi32>
    %66 = vector.broadcast %65 : vector<2x1xi32> to vector<2x128xi32>
    %67 = arith.cmpi eq, %57, %66 : vector<2x128xi32>
    %68 = arith.extui %67 : vector<2x128xi1> to vector<2x128xi32>
    %69 = arith.sitofp %68 : vector<2x128xi32> to vector<2x128xf32>
    %c0_28 = arith.constant 0 : index
    %c0_29 = arith.constant 0 : index
    %70 = vector.load %arg9[%c0_28, %c0_29] : memref<2x128xf32, #tpu.memory_space<vmem>>, vector<2x128xf32>
    tpu.vector_store %arg9[%c0_28, %c0_29], %69 {strides = array<i32>} : memref<2x128xf32, #tpu.memory_space<vmem>>, vector<2x128xf32>,
    return
  }
  func.func @transform_0(%arg0: i32) -> (i32, i32) {
    %c0_i32 = arith.constant 0 : i32
    %c0_i32_0 = arith.constant 0 : i32
    %c0_i32_1 = arith.constant 0 : i32
    return %c0_i32, %c0_i32_0 : i32, i32
  }
  func.func @transform_1(%arg0: i32) -> (i32, i32) {
    %c0_i32 = arith.constant 0 : i32
    %c0_i32_0 = arith.constant 0 : i32
    %c0_i32_1 = arith.constant 0 : i32
    return %c0_i32, %c0_i32_0 : i32, i32
  }
  func.func @transform_2(%arg0: i32) -> (i32, i32) {
    %c0_i32 = arith.constant 0 : i32
    %c0_i32_0 = arith.constant 0 : i32
    %c0_i32_1 = arith.constant 0 : i32
    return %c0_i32, %c0_i32_0 : i32, i32
  }
  func.func @transform_3(%arg0: i32) -> (i32, i32) {
    %c0_i32 = arith.constant 0 : i32
    %c0_i32_0 = arith.constant 0 : i32
    %c0_i32_1 = arith.constant 0 : i32
    return %c0_i32, %c0_i32_0 : i32, i32
  }
  func.func @transform_4(%arg0: i32) -> (i32, i32) {
    %c0_i32 = arith.constant 0 : i32
    %c0_i32_0 = arith.constant 0 : i32
    %c0_i32_1 = arith.constant 0 : i32
    return %c0_i32, %c0_i32_0 : i32, i32
  }
  func.func @transform_5(%arg0: i32) -> (i32, i32) {
    %c0_i32 = arith.constant 0 : i32
    %c0_i32_0 = arith.constant 0 : i32
    %c0_i32_1 = arith.constant 0 : i32
    return %c0_i32, %c0_i32_0 : i32, i32
  }
  func.func @transform_6(%arg0: i32) -> (i32, i32, i32) {
    %c0_i32 = arith.constant 0 : i32
    %c0_i32_0 = arith.constant 0 : i32
    %c0_i32_1 = arith.constant 0 : i32
    return %arg0, %c0_i32, %c0_i32_0 : i32, i32, i32
  }
}

module attributes {stable_mosaic.version = 11 : i64} {
  func.func @_encoder_kernel(%arg0: i32, %arg1: memref<1x2x128xf32, #tpu.memory_space<vmem>>, %arg2: memref<2x1xi32, #tpu.memory_space<vmem>>, %arg3: memref<256x512xbf16, #tpu.memory_space<vmem>>, %arg4: memref<1x512xf32, #tpu.memory_space<vmem>>, %arg5: memref<2x128xf32, #tpu.memory_space<vmem>>, %arg6: memref<2x128xf32, #tpu.memory_space<vmem>>) attributes {dimension_semantics = [#tpu.dimension_semantics<arbitrary>], iteration_bounds = array<i64: 8>, scalar_prefetch = 0 : i64, scratch_operands = 1 : i64, tpu.core_type = #tpu.core_type<tc>, window_params = [{transform_indices = @transform_0, window_bounds = array<i64: 1, 2, 128>}, {pipeline_mode = #tpu.pipeline_mode<synchronous>, transform_indices = @transform_1, window_bounds = array<i64: 2, 1>}, {pipeline_mode = #tpu.pipeline_mode<synchronous>, transform_indices = @transform_2, window_bounds = array<i64: 256, 512>}, {pipeline_mode = #tpu.pipeline_mode<synchronous>, transform_indices = @transform_3, window_bounds = array<i64: 1, 512>}, {pipeline_mode = #tpu.pipeline_mode<synchronous>, transform_indices = @transform_4, window_bounds = array<i64: 2, 128>}]} {
    %c0_i32 = arith.constant 0 : i32
    %0 = arith.cmpi eq, %arg0, %c0_i32 : i32
    %1 = arith.extui %0 : i1 to i32
    %c0_i32_0 = arith.constant 0 : i32
    %2 = arith.cmpi ne, %1, %c0_i32_0 : i32
    scf.if %2 {
      %cst_20 = arith.constant 0.000000e+00 : f32
      %44 = vector.broadcast %cst_20 : f32 to vector<2x128xf32>
      %c0_21 = arith.constant 0 : index
      %c0_22 = arith.constant 0 : index
      %45 = vector.load %arg6[%c0_21, %c0_22] : memref<2x128xf32, #tpu.memory_space<vmem>>, vector<2x128xf32>
      tpu.vector_store %arg6[%c0_21, %c0_22], %44 {strides = array<i32>} : memref<2x128xf32, #tpu.memory_space<vmem>>, vector<2x128xf32>,
      %cst_23 = arith.constant 0.000000e+00 : f32
      %46 = vector.broadcast %cst_23 : f32 to vector<2x128xf32>
      %c0_24 = arith.constant 0 : index
      %c0_25 = arith.constant 0 : index
      %47 = vector.load %arg5[%c0_24, %c0_25] : memref<2x128xf32, #tpu.memory_space<vmem>>, vector<2x128xf32>
      tpu.vector_store %arg5[%c0_24, %c0_25], %46 {strides = array<i32>} : memref<2x128xf32, #tpu.memory_space<vmem>>, vector<2x128xf32>,
    } else {
    }
    %c0 = arith.constant 0 : index
    %c0_1 = arith.constant 0 : index
    %c0_2 = arith.constant 0 : index
    %3 = vector.load %arg1[%c0, %c0_1, %c0_2] : memref<1x2x128xf32, #tpu.memory_space<vmem>>, vector<1x2x128xf32>
    %4 = vector.shape_cast %3 : vector<1x2x128xf32> to vector<2x128xf32>
    %c0_3 = arith.constant 0 : index
    %c0_4 = arith.constant 0 : index
    %5 = vector.load %arg6[%c0_3, %c0_4] : memref<2x128xf32, #tpu.memory_space<vmem>>, vector<2x128xf32>
    %c0_5 = arith.constant 0 : index
    %c0_6 = arith.constant 0 : index
    %6 = vector.load %arg3[%c0_5, %c0_6] : memref<256x512xbf16, #tpu.memory_space<vmem>>, vector<256x512xbf16>
    %c0_7 = arith.constant 0 : index
    %c0_8 = arith.constant 0 : index
    %7 = vector.load %arg4[%c0_7, %c0_8] : memref<1x512xf32, #tpu.memory_space<vmem>>, vector<1x512xf32>
    %8 = tpu.concatenate %4, %5 in 1 : vector<2x128xf32>, vector<2x128xf32> -> vector<2x256xf32>
    %9 = arith.truncf %8 : vector<2x256xf32> to vector<2x256xbf16>
    %cst = arith.constant dense<0.000000e+00> : vector<2x512xf32>
    %10 = tpu.matmul %9, %6, %cst {dimension_numbers = #tpu.dot_dimension_numbers<[1], [0], [0], [1], [0, 0, 1, 1], [], []>} : vector<2x256xbf16>, vector<256x512xbf16>, vector<2x512xf32> -> vector<2x512xf32>
    %11 = vector.broadcast %7 : vector<1x512xf32> to vector<2x512xf32>
    %12 = arith.addf %10, %11 : vector<2x512xf32>
    %13 = vector.extract_strided_slice %12 {offsets = [0, 0], sizes = [2, 128], strides = [1, 1]} : vector<2x512xf32> to vector<2x128xf32>
    %14 = arith.negf %13 : vector<2x128xf32>
    %15 = math.exp %14 : vector<2x128xf32>
    %cst_9 = arith.constant 1.000000e+00 : f32
    %16 = vector.broadcast %cst_9 : f32 to vector<2x128xf32>
    %17 = arith.addf %16, %15 : vector<2x128xf32>
    %18 = arith.divf %16, %17 : vector<2x128xf32>
    %19 = vector.extract_strided_slice %12 {offsets = [0, 128], sizes = [2, 128], strides = [1, 1]} : vector<2x512xf32> to vector<2x128xf32>
    %20 = arith.negf %19 : vector<2x128xf32>
    %21 = math.exp %20 : vector<2x128xf32>
    %cst_10 = arith.constant 1.000000e+00 : f32
    %22 = vector.broadcast %cst_10 : f32 to vector<2x128xf32>
    %23 = arith.addf %22, %21 : vector<2x128xf32>
    %24 = arith.divf %22, %23 : vector<2x128xf32>
    %25 = vector.extract_strided_slice %12 {offsets = [0, 256], sizes = [2, 128], strides = [1, 1]} : vector<2x512xf32> to vector<2x128xf32>
    %26 = vector.extract_strided_slice %12 {offsets = [0, 384], sizes = [2, 128], strides = [1, 1]} : vector<2x512xf32> to vector<2x128xf32>
    %27 = arith.mulf %18, %26 : vector<2x128xf32>
    %28 = arith.addf %25, %27 : vector<2x128xf32>
    %29 = math.tanh %28 : vector<2x128xf32>
    %cst_11 = arith.constant 1.000000e+00 : f32
    %30 = vector.broadcast %cst_11 : f32 to vector<2x128xf32>
    %31 = arith.subf %30, %24 : vector<2x128xf32>
    %32 = arith.mulf %31, %29 : vector<2x128xf32>
    %33 = arith.mulf %24, %5 : vector<2x128xf32>
    %34 = arith.addf %32, %33 : vector<2x128xf32>
    %c0_12 = arith.constant 0 : index
    %c0_13 = arith.constant 0 : index
    %35 = vector.load %arg6[%c0_12, %c0_13] : memref<2x128xf32, #tpu.memory_space<vmem>>, vector<2x128xf32>
    tpu.vector_store %arg6[%c0_12, %c0_13], %34 {strides = array<i32>} : memref<2x128xf32, #tpu.memory_space<vmem>>, vector<2x128xf32>,
    %c0_14 = arith.constant 0 : index
    %c0_15 = arith.constant 0 : index
    %36 = vector.load %arg2[%c0_14, %c0_15] : memref<2x1xi32, #tpu.memory_space<vmem>>, vector<2x1xi32>
    %37 = vector.broadcast %arg0 : i32 to vector<2x1xi32>
    %38 = arith.cmpi eq, %36, %37 : vector<2x1xi32>
    %c0_16 = arith.constant 0 : index
    %c0_17 = arith.constant 0 : index
    %39 = vector.load %arg5[%c0_16, %c0_17] : memref<2x128xf32, #tpu.memory_space<vmem>>, vector<2x128xf32>
    %40 = vector.shape_cast %38 : vector<2x1xi1> to vector<2x1xi1>
    %41 = vector.broadcast %40 : vector<2x1xi1> to vector<2x128xi1>
    %42 = arith.select %41, %34, %39 : vector<2x128xi1>, vector<2x128xf32>
    %c0_18 = arith.constant 0 : index
    %c0_19 = arith.constant 0 : index
    %43 = vector.load %arg5[%c0_18, %c0_19] : memref<2x128xf32, #tpu.memory_space<vmem>>, vector<2x128xf32>
    tpu.vector_store %arg5[%c0_18, %c0_19], %42 {strides = array<i32>} : memref<2x128xf32, #tpu.memory_space<vmem>>, vector<2x128xf32>,
    return
  }
  func.func @transform_0(%arg0: i32) -> (i32, i32, i32) {
    %c0_i32 = arith.constant 0 : i32
    %c0_i32_0 = arith.constant 0 : i32
    %c0_i32_1 = arith.constant 0 : i32
    return %arg0, %c0_i32, %c0_i32_0 : i32, i32, i32
  }
  func.func @transform_1(%arg0: i32) -> (i32, i32) {
    %c0_i32 = arith.constant 0 : i32
    %c0_i32_0 = arith.constant 0 : i32
    %c0_i32_1 = arith.constant 0 : i32
    return %c0_i32, %c0_i32_0 : i32, i32
  }
  func.func @transform_2(%arg0: i32) -> (i32, i32) {
    %c0_i32 = arith.constant 0 : i32
    %c0_i32_0 = arith.constant 0 : i32
    %c0_i32_1 = arith.constant 0 : i32
    return %c0_i32, %c0_i32_0 : i32, i32
  }
  func.func @transform_3(%arg0: i32) -> (i32, i32) {
    %c0_i32 = arith.constant 0 : i32
    %c0_i32_0 = arith.constant 0 : i32
    %c0_i32_1 = arith.constant 0 : i32
    return %c0_i32, %c0_i32_0 : i32, i32
  }
  func.func @transform_4(%arg0: i32) -> (i32, i32) {
    %c0_i32 = arith.constant 0 : i32
    %c0_i32_0 = arith.constant 0 : i32
    %c0_i32_1 = arith.constant 0 : i32
    return %c0_i32, %c0_i32_0 : i32, i32
  }
}

</mosaic_0001>

<llo_original>
// kernel: seq2seq_forward.2
$region0: #{seq2seq_forward.2}
  #allocation0 [shape = 'u32[]', space=smem, size = 0x4, offset = 0x4, fixed_abs, tag = 'smem constant byte address 0x4 - core index']
  #allocation1 [shape = 'u32[144,128]{1,0:T(1,128)}', space=vmem, size = 0x12000, scoped, tag = 'internal scratch']
  #allocation2 [shape = 'f32[2,128]{1,0:T(2,128)}', space=vmem, size = 0x400, scoped, tag = 'scratch operand']
  %s0 = inlined_call_operand.vmem [shape: f32[8,2,128], index: 0, kind: input, shape index: {}]
  %s1 = inlined_call_operand.vmem [shape: s32[2,1], index: 1, kind: input, shape index: {}]
  %s2 = inlined_call_operand.hbm [shape: bf16[256,512], index: 2, kind: input, shape index: {}]
  %s3 = inlined_call_operand.vmem [shape: f32[1,512], index: 3, kind: input, shape index: {}]
  %s4 = inlined_call_operand.vmem [shape: f32[2,128], index: 4, kind: output, shape index: {}]
  %s5 = sld [smem:[#allocation0]]
  $region57: #{seq2seq_forward.2} parent=0
    _
  %s7 = ssub.s32 1, %s5
  %s8 = scalar_select 0, %s7, %s5
  $region1: #{seq2seq_forward.2} parent=0
    #allocation3 [shape = 'u8[262144]{0}', space=vmem, size = 0x40000, scoped, tag = 'input window, operand 2, single buffered']
    #allocation4 [shape = 's32[2]{0}', space=sflag, size = 0x8, scoped, tag = 'scoped memory for seq2seq_forward.2']
    %9 = vsyncpa [#allocation4], 0
    loop: start=0, step=1, limit=10
    $region2: #{seq2seq_forward.2} parent=1 // loop_pre_header
      _
    $region3: #{seq2seq_forward.2} parent=1 // loop_header
      %s11 = sphi 0, %s15
      %p12 = scmp.ge.s32.totalorder %s11, 10
      %s21 = sphi 0, %s23
      %s24 = sphi 0, %s21
      %s25 = sphi 0, %s24
      %s41 = sphi 0, %s25
      %s45 = sphi 0, %s45
      %s47 = sphi 0, %s45
      %s48 = sphi 0, %s47
      %s62 = sphi 0, %s48
      %s66 = sphi 0, %s66
      %s68 = sphi 0, %s66
      %s69 = sphi 0, %s68
      %s83 = sphi 0, %s69
      %s87 = sphi 0, %s87
      %s89 = sphi 0, %s87
      %s90 = sphi 0, %s89
      %s104 = sphi 0, %s90
      %s108 = sphi 0, %s108
      %s110 = sphi 0, %s108
      %s111 = sphi 0, %s110
      %s125 = sphi 0, %s111
    $region4: #{seq2seq_forward.2} parent=1 // loop_header_branch
      %14 = sbr.rel (%p12) target = $region8
    $region5: #{seq2seq_forward.2} parent=1 // loop_body
      %s16 = ssub.s32 %s11, 1
      %s17 = ssub.s32 %s11, 2
      %s18 = sadd.s32 %s11, 1
      %s19 = ssub.s32 %s11, %s18
      %p20 = scmp.eq.s32.totalorder %s19, 0
      %s22 = sadd.s32 %s21, 1
      %s23 = scalar_select %p20, %s21, %s22
      %p26 = pneg %p20
      %p27 = scmp.eq.s32.totalorder %s11, 7
      %p28 = por %p26, %p27
      %p29 = scmp.ne.s32.totalorder %s21, %s24
      %p30 = scmp.eq.s32.totalorder %s11, 0
      %p31 = por %p29, %p30
      %p32 = scmp.ne.s32.totalorder %s21, %s24
      %p33 = scmp.eq.s32.totalorder %s16, 7
      %p34 = por %p32, %p33
      %p35 = scmp.ne.s32.totalorder %s24, %s25
      %p36 = scmp.eq.s32.totalorder %s16, 0
      %p37 = por %p35, %p36
      %p38 = scmp.ne.s32.totalorder %s24, %s25
      %p39 = scmp.eq.s32.totalorder %s17, 7
      %p40 = por %p38, %p39
      %p42 = scmp.ne.s32.totalorder %s25, %s41
      %p43 = scmp.eq.s32.totalorder %s17, 0
      %p44 = por %p42, %p43
      %s46 = sadd.s32 %s45, 1
      %p49 = scmp.eq.s32.totalorder %s11, 7
      %p50 = scmp.ne.s32.totalorder %s45, %s47
      %p51 = scmp.eq.s32.totalorder %s11, 0
      %p52 = por %p50, %p51
      %p53 = scmp.ne.s32.totalorder %s45, %s47
      %p54 = scmp.eq.s32.totalorder %s16, 7
      %p55 = por %p53, %p54
      %p56 = scmp.ne.s32.totalorder %s47, %s48
      %p57 = scmp.eq.s32.totalorder %s16, 0
      %p58 = por %p56, %p57
      %p59 = scmp.ne.s32.totalorder %s47, %s48
      %p60 = scmp.eq.s32.totalorder %s17, 7
      %p61 = por %p59, %p60
      %p63 = scmp.ne.s32.totalorder %s48, %s62
      %p64 = scmp.eq.s32.totalorder %s17, 0
      %p65 = por %p63, %p64
      %s67 = sadd.s32 %s66, 1
      %p70 = scmp.eq.s32.totalorder %s11, 7
      %p71 = scmp.ne.s32.totalorder %s66, %s68
      %p72 = scmp.eq.s32.totalorder %s11, 0
      %p73 = por %p71, %p72
      %p74 = scmp.ne.s32.totalorder %s66, %s68
      %p75 = scmp.eq.s32.totalorder %s16, 7
      %p76 = por %p74, %p75
      %p77 = scmp.ne.s32.totalorder %s68, %s69
      %p78 = scmp.eq.s32.totalorder %s16, 0
      %p79 = por %p77, %p78
      %p80 = scmp.ne.s32.totalorder %s68, %s69
      %p81 = scmp.eq.s32.totalorder %s17, 7
      %p82 = por %p80, %p81
      %p84 = scmp.ne.s32.totalorder %s69, %s83
      %p85 = scmp.eq.s32.totalorder %s17, 0
      %p86 = por %p84, %p85
      %s88 = sadd.s32 %s87, 1
      %p91 = scmp.eq.s32.totalorder %s11, 7
      %p92 = scmp.ne.s32.totalorder %s87, %s89
      %p93 = scmp.eq.s32.totalorder %s11, 0
      %p94 = por %p92, %p93
      %p95 = scmp.ne.s32.totalorder %s87, %s89
      %p96 = scmp.eq.s32.totalorder %s16, 7
      %p97 = por %p95, %p96
      %p98 = scmp.ne.s32.totalorder %s89, %s90
      %p99 = scmp.eq.s32.totalorder %s16, 0
      %p100 = por %p98, %p99
      %p101 = scmp.ne.s32.totalorder %s89, %s90
      %p102 = scmp.eq.s32.totalorder %s17, 7
      %p103 = por %p101, %p102
      %p105 = scmp.ne.s32.totalorder %s90, %s104
      %p106 = scmp.eq.s32.totalorder %s17, 0
      %p107 = por %p105, %p106
      %s109 = sadd.s32 %s108, 1
      %p112 = scmp.eq.s32.totalorder %s11, 7
      %p113 = scmp.ne.s32.totalorder %s108, %s110
      %p114 = scmp.eq.s32.totalorder %s11, 0
      %p115 = por %p113, %p114
      %p116 = scmp.ne.s32.totalorder %s108, %s110
      %p117 = scmp.eq.s32.totalorder %s16, 7
      %p118 = por %p116, %p117
      %p119 = scmp.ne.s32.totalorder %s110, %s111
      %p120 = scmp.eq.s32.totalorder %s16, 0
      %p121 = por %p119, %p120
      %p122 = scmp.ne.s32.totalorder %s110, %s111
      %p123 = scmp.eq.s32.totalorder %s17, 7
      %p124 = por %p122, %p123
      %p126 = scmp.ne.s32.totalorder %s111, %s125
      %p127 = scmp.eq.s32.totalorder %s17, 0
      %p128 = por %p126, %p127
      %p129 = scmp.le.s32.totalorder 1, %s11
      %p130 = scmp.lt.s32.totalorder %s11, 9
      %p131 = pnand %p129, %p130
      %p132 = pneg %p131
      // Predicated region
      $region9: #{seq2seq_forward.2} parent=5 // pred_check
        _
      $region10: #{seq2seq_forward.2} parent=5 // pred_check_branch
        %134 = sbr.rel (%p131) target = $region12
      $region11: #{seq2seq_forward.2} parent=5 // pred_region
        %s135 = ssub.s32 %s11, 1
        // Predicated region
        $region13: #{seq2seq_forward.2} parent=11 // pred_check
          %p136 = pneg %p58
        $region14: #{seq2seq_forward.2} parent=11 // pred_check_branch
          %138 = sbr.rel (%p136) target = $region16
        $region15: #{seq2seq_forward.2} parent=11 // pred_region
          _
        $region16: #{seq2seq_forward.2} parent=11 // pred_fallthru
          _
        // Predicated region
        $region17: #{seq2seq_forward.2} parent=11 // pred_check
          %p139 = pneg %p79
        $region18: #{seq2seq_forward.2} parent=11 // pred_check_branch
          %141 = sbr.rel (%p139) target = $region20
        $region19: #{seq2seq_forward.2} parent=11 // pred_region
          %s143 = ssub.s32 8192, 8192
          %144 = vsyncadd [#allocation4], %s143
          %s145 = sshll.u32 [#allocation3], 4
          %s146 = int_to_ptr.vmem [resolvable:$true] %s145
          %151 = dma.hbm_to_vmem [thread:$0]  %s2, 8192, %s146, [#allocation4], 256, 256, 16
        $region20: #{seq2seq_forward.2} parent=11 // pred_fallthru
          _
        // Predicated region
        $region21: #{seq2seq_forward.2} parent=11 // pred_check
          %p152 = pneg %p100
        $region22: #{seq2seq_forward.2} parent=11 // pred_check_branch
          %154 = sbr.rel (%p152) target = $region24
        $region23: #{seq2seq_forward.2} parent=11 // pred_region
          _
        $region24: #{seq2seq_forward.2} parent=11 // pred_fallthru
          _
      $region12: #{seq2seq_forward.2} parent=5 // pred_fallthru
        _
      %p155 = scmp.lt.s32.totalorder %s11, 8
      // Predicated region
      $region25: #{seq2seq_forward.2} parent=5 // pred_check
        %p156 = pneg %p155
      $region26: #{seq2seq_forward.2} parent=5 // pred_check_branch
        %158 = sbr.rel (%p156) target = $region28
      $region27: #{seq2seq_forward.2} parent=5 // pred_region
        // Predicated region
        $region29: #{seq2seq_forward.2} parent=27 // pred_check
          %p159 = pneg %p31
        $region30: #{seq2seq_forward.2} parent=27 // pred_check_branch
          %161 = sbr.rel (%p159) target = $region32
        $region31: #{seq2seq_forward.2} parent=27 // pred_region
          %p162 = scmp.lt.s32.totalorder %s11, 7
          %s163 = scalar_select %p162, %s11, 7
          %s164 = smul.addr %s163, 2
          %s165 = scalar_lea.vmem %s0, %s164
        $region32: #{seq2seq_forward.2} parent=27 // pred_fallthru
          _
      $region28: #{seq2seq_forward.2} parent=5 // pred_fallthru
        _
      %p166 = scmp.le.s32.totalorder 1, %s11
      %p167 = scmp.lt.s32.totalorder %s11, 9
      %p168 = pnand %p166, %p167
      %p169 = pneg %p168
      // Predicated region
      $region33: #{seq2seq_forward.2} parent=5 // pred_check
        _
      $region34: #{seq2seq_forward.2} parent=5 // pred_check_branch
        %171 = sbr.rel (%p168) target = $region36
      $region35: #{seq2seq_forward.2} parent=5 // pred_region
        %s172 = ssub.s32 %s11, 1
        // Predicated region
        $region37: #{seq2seq_forward.2} parent=35 // pred_check
          %p173 = pneg %p79
        $region38: #{seq2seq_forward.2} parent=35 // pred_check_branch
          %175 = sbr.rel (%p173) target = $region40
        $region39: #{seq2seq_forward.2} parent=35 // pred_region
          %176 = dma.done [#allocation4], 8192
        $region40: #{seq2seq_forward.2} parent=35 // pred_fallthru
          _
        %p177 = scmp.lt.s32.totalorder %s16, 7
        %s178 = scalar_select %p177, %s16, 7
        %s179 = smul.addr %s178, 2
        %s180 = scalar_lea.vmem %s0, %s179
        %p181 = pneg %p37
        %p182 = pneg %p34
        %p183 = pneg %p58
        %p184 = pneg %p55
        %p185 = pneg %p79
        %p186 = pneg %p76
        %p187 = pneg %p100
        %p188 = pneg %p97
        %p189 = pneg %p121
        %p190 = pneg %p118
        %p191 = scmp.lt.s32.totalorder %s16, 7
        %s192 = scalar_select %p191, %s16, 7
        %s193 = smul.addr %s192, 2
        %s194 = scalar_lea.vmem %s0, %s193
        %p195 = scmp.eq.s32.totalorder %s16, 0
        // Predicated region
        $region41: #{seq2seq_forward.2} parent=35 // pred_check
          %p196 = pneg %p195
        $region42: #{seq2seq_forward.2} parent=35 // pred_check_branch
          %198 = sbr.rel (%p196) target = $region44
        $region43: #{seq2seq_forward.2} parent=35 // pred_region
          %199 = vst [vmem:[#allocation2] sm:$0x3] 0.0
          %200 = vst [vmem:[%s4] sm:$0x3] 0.0
        $region44: #{seq2seq_forward.2} parent=35 // pred_fallthru
          _
        %v201 = vld [vmem:[%s194] sm:$0x3]
        %v202 = vld [vmem:[#allocation2] sm:$0x3]
        %v203 = vld [vmem:[#allocation3] sm:$0xff]
        %v204 = vld [vmem:[#allocation3 + $0x8] sm:$0xff]
        %v205 = vld [vmem:[#allocation3 + $0x10] sm:$0xff]
        %v206 = vld [vmem:[#allocation3 + $0x18] sm:$0xff]
        %v207 = vld [vmem:[#allocation3 + $0x20] sm:$0xff]
        %v208 = vld [vmem:[#allocation3 + $0x28] sm:$0xff]
        %v209 = vld [vmem:[#allocation3 + $0x30] sm:$0xff]
        %v210 = vld [vmem:[#allocation3 + $0x38] sm:$0xff]
        %v211 = vld [vmem:[#allocation3 + $0x40] sm:$0xff]
        %v212 = vld [vmem:[#allocation3 + $0x48] sm:$0xff]
        %v213 = vld [vmem:[#allocation3 + $0x50] sm:$0xff]
        %v214 = vld [vmem:[#allocation3 + $0x58] sm:$0xff]
        %v215 = vld [vmem:[#allocation3 + $0x60] sm:$0xff]
        %v216 = vld [vmem:[#allocation3 + $0x68] sm:$0xff]
        %v217 = vld [vmem:[#allocation3 + $0x70] sm:$0xff]
        %v218 = vld [vmem:[#allocation3 + $0x78] sm:$0xff]
        %v219 = vld [vmem:[#allocation3 + $0x80] sm:$0xff]
        %v220 = vld [vmem:[#allocation3 + $0x88] sm:$0xff]
        %v221 = vld [vmem:[#allocation3 + $0x90] sm:$0xff]
        %v222 = vld [vmem:[#allocation3 + $0x98] sm:$0xff]
        %v223 = vld [vmem:[#allocation3 + $0xa0] sm:$0xff]
        %v224 = vld [vmem:[#allocation3 + $0xa8] sm:$0xff]
        %v225 = vld [vmem:[#allocation3 + $0xb0] sm:$0xff]
        %v226 = vld [vmem:[#allocation3 + $0xb8] sm:$0xff]
        %v227 = vld [vmem:[#allocation3 + $0xc0] sm:$0xff]
        %v228 = vld [vmem:[#allocation3 + $0xc8] sm:$0xff]
        %v229 = vld [vmem:[#allocation3 + $0xd0] sm:$0xff]
        %v230 = vld [vmem:[#allocation3 + $0xd8] sm:$0xff]
        %v231 = vld [vmem:[#allocation3 + $0xe0] sm:$0xff]
        %v232 = vld [vmem:[#allocation3 + $0xe8] sm:$0xff]
        %v233 = vld [vmem:[#allocation3 + $0xf0] sm:$0xff]
        %v234 = vld [vmem:[#allocation3 + $0xf8] sm:$0xff]
        %v235 = vld [vmem:[#allocation3 + $0x100] sm:$0xff]
        %v236 = vld [vmem:[#allocation3 + $0x108] sm:$0xff]
        %v237 = vld [vmem:[#allocation3 + $0x110] sm:$0xff]
        %v238 = vld [vmem:[#allocation3 + $0x118] sm:$0xff]
        %v239 = vld [vmem:[#allocation3 + $0x120] sm:$0xff]
        %v240 = vld [vmem:[#allocation3 + $0x128] sm:$0xff]
        %v241 = vld [vmem:[#allocation3 + $0x130] sm:$0xff]
        %v242 = vld [vmem:[#allocation3 + $0x138] sm:$0xff]
        %v243 = vld [vmem:[#allocation3 + $0x140] sm:$0xff]
        %v244 = vld [vmem:[#allocation3 + $0x148] sm:$0xff]
        %v245 = vld [vmem:[#allocation3 + $0x150] sm:$0xff]
        %v246 = vld [vmem:[#allocation3 + $0x158] sm:$0xff]
        %v247 = vld [vmem:[#allocation3 + $0x160] sm:$0xff]
        %v248 = vld [vmem:[#allocation3 + $0x168] sm:$0xff]
        %v249 = vld [vmem:[#allocation3 + $0x170] sm:$0xff]
        %v250 = vld [vmem:[#allocation3 + $0x178] sm:$0xff]
        %v251 = vld [vmem:[#allocation3 + $0x180] sm:$0xff]
        %v252 = vld [vmem:[#allocation3 + $0x188] sm:$0xff]
        %v253 = vld [vmem:[#allocation3 + $0x190] sm:$0xff]
        %v254 = vld [vmem:[#allocation3 + $0x198] sm:$0xff]
        %v255 = vld [vmem:[#allocation3 + $0x1a0] sm:$0xff]
        %v256 = vld [vmem:[#allocation3 + $0x1a8] sm:$0xff]
        %v257 = vld [vmem:[#allocation3 + $0x1b0] sm:$0xff]
        %v258 = vld [vmem:[#allocation3 + $0x1b8] sm:$0xff]
        %v259 = vld [vmem:[#allocation3 + $0x1c0] sm:$0xff]
        %v260 = vld [vmem:[#allocation3 + $0x1c8] sm:$0xff]
        %v261 = vld [vmem:[#allocation3 + $0x1d0] sm:$0xff]
        %v262 = vld [vmem:[#allocation3 + $0x1d8] sm:$0xff]
        %v263 = vld [vmem:[#allocation3 + $0x1e0] sm:$0xff]
        %v264 = vld [vmem:[#allocation3 + $0x1e8] sm:$0xff]
        %v265 = vld [vmem:[#allocation3 + $0x1f0] sm:$0xff]
        %v266 = vld [vmem:[#allocation3 + $0x1f8] sm:$0xff]
        %v267 = vld [vmem:[%s3] sm:$0xf]
        %v268 = vpack.c.bf16 %v201, %v201
        %v269 = vpack.c.bf16 %v202, %v202
        %v271 = vlaneseq
        %v272 = vshrl.u32 %v271, 7
        %v273 = vsub.s32 0, %v272
        %v274 = vrot.slane %v267, %v273
        %v275 = vlaneseq
        %v276 = vshrl.u32 %v275, 7
        %v277 = vsub.s32 1, %v276
        %v278 = vrot.slane %v267, %v277
        %v279 = vlaneseq
        %v280 = vshrl.u32 %v279, 7
        %v281 = vsub.s32 2, %v280
        %v282 = vrot.slane %v267, %v281
        %v283 = vlaneseq
        %v284 = vshrl.u32 %v283, 7
        %v285 = vsub.s32 3, %v284
        %v286 = vrot.slane %v267, %v285
        %v355 = vunpack.c.l.b16 %v203
        %v356 = vunpack.c.h.b16 %v203
        %v357 = vunpack.c.l.b16 %v204
        %v358 = vunpack.c.h.b16 %v204
        %v359 = vunpack.c.l.b16 %v205
        %v360 = vunpack.c.h.b16 %v205
        %v361 = vunpack.c.l.b16 %v206
        %v362 = vunpack.c.h.b16 %v206
        %v363 = vunpack.c.l.b16 %v207
        %v364 = vunpack.c.h.b16 %v207
        %v365 = vunpack.c.l.b16 %v208
        %v366 = vunpack.c.h.b16 %v208
        %v367 = vunpack.c.l.b16 %v209
        %v368 = vunpack.c.h.b16 %v209
        %v369 = vunpack.c.l.b16 %v210
        %v370 = vunpack.c.h.b16 %v210
        %v371 = vunpack.c.l.b16 %v211
        %v372 = vunpack.c.h.b16 %v211
        %v373 = vunpack.c.l.b16 %v212
        %v374 = vunpack.c.h.b16 %v212
        %v375 = vunpack.c.l.b16 %v213
        %v376 = vunpack.c.h.b16 %v213
        %v377 = vunpack.c.l.b16 %v214
        %v378 = vunpack.c.h.b16 %v214
        %v379 = vunpack.c.l.b16 %v215
        %v380 = vunpack.c.h.b16 %v215
        %v381 = vunpack.c.l.b16 %v216
        %v382 = vunpack.c.h.b16 %v216
        %v383 = vunpack.c.l.b16 %v217
        %v384 = vunpack.c.h.b16 %v217
        %v385 = vunpack.c.l.b16 %v218
        %v386 = vunpack.c.h.b16 %v218
        %v387 = vunpack.c.l.b16 %v219
        %v388 = vunpack.c.h.b16 %v219
        %v389 = vunpack.c.l.b16 %v220
        %v390 = vunpack.c.h.b16 %v220
        %v391 = vunpack.c.l.b16 %v221
        %v392 = vunpack.c.h.b16 %v221
        %v393 = vunpack.c.l.b16 %v222
        %v394 = vunpack.c.h.b16 %v222
        %v395 = vunpack.c.l.b16 %v223
        %v396 = vunpack.c.h.b16 %v223
        %v397 = vunpack.c.l.b16 %v224
        %v398 = vunpack.c.h.b16 %v224
        %v399 = vunpack.c.l.b16 %v225
        %v400 = vunpack.c.h.b16 %v225
        %v401 = vunpack.c.l.b16 %v226
        %v402 = vunpack.c.h.b16 %v226
        %v403 = vunpack.c.l.b16 %v227
        %v404 = vunpack.c.h.b16 %v227
        %v405 = vunpack.c.l.b16 %v228
        %v406 = vunpack.c.h.b16 %v228
        %v407 = vunpack.c.l.b16 %v229
        %v408 = vunpack.c.h.b16 %v229
        %v409 = vunpack.c.l.b16 %v230
        %v410 = vunpack.c.h.b16 %v230
        %v411 = vunpack.c.l.b16 %v231
        %v412 = vunpack.c.h.b16 %v231
        %v413 = vunpack.c.l.b16 %v232
        %v414 = vunpack.c.h.b16 %v232
        %v415 = vunpack.c.l.b16 %v233
        %v416 = vunpack.c.h.b16 %v233
        %v417 = vunpack.c.l.b16 %v234
        %v418 = vunpack.c.h.b16 %v234
        %v419 = vunpack.c.l.b16 %v235
        %v420 = vunpack.c.h.b16 %v235
        %v421 = vunpack.c.l.b16 %v236
        %v422 = vunpack.c.h.b16 %v236
        %v423 = vunpack.c.l.b16 %v237
        %v424 = vunpack.c.h.b16 %v237
        %v425 = vunpack.c.l.b16 %v238
        %v426 = vunpack.c.h.b16 %v238
        %v427 = vunpack.c.l.b16 %v239
        %v428 = vunpack.c.h.b16 %v239
        %v429 = vunpack.c.l.b16 %v240
        %v430 = vunpack.c.h.b16 %v240
        %v431 = vunpack.c.l.b16 %v241
        %v432 = vunpack.c.h.b16 %v241
        %v433 = vunpack.c.l.b16 %v242
        %v434 = vunpack.c.h.b16 %v242
        %v435 = vunpack.c.l.b16 %v243
        %v436 = vunpack.c.h.b16 %v243
        %v437 = vunpack.c.l.b16 %v244
        %v438 = vunpack.c.h.b16 %v244
        %v439 = vunpack.c.l.b16 %v245
        %v440 = vunpack.c.h.b16 %v245
        %v441 = vunpack.c.l.b16 %v246
        %v442 = vunpack.c.h.b16 %v246
        %v443 = vunpack.c.l.b16 %v247
        %v444 = vunpack.c.h.b16 %v247
        %v445 = vunpack.c.l.b16 %v248
        %v446 = vunpack.c.h.b16 %v248
        %v447 = vunpack.c.l.b16 %v249
        %v448 = vunpack.c.h.b16 %v249
        %v449 = vunpack.c.l.b16 %v250
        %v450 = vunpack.c.h.b16 %v250
        %v451 = vunpack.c.l.b16 %v251
        %v452 = vunpack.c.h.b16 %v251
        %v453 = vunpack.c.l.b16 %v252
        %v454 = vunpack.c.h.b16 %v252
        %v455 = vunpack.c.l.b16 %v253
        %v456 = vunpack.c.h.b16 %v253
        %v457 = vunpack.c.l.b16 %v254
        %v458 = vunpack.c.h.b16 %v254
        %v459 = vunpack.c.l.b16 %v255
        %v460 = vunpack.c.h.b16 %v255
        %v461 = vunpack.c.l.b16 %v256
        %v462 = vunpack.c.h.b16 %v256
        %v463 = vunpack.c.l.b16 %v257
        %v464 = vunpack.c.h.b16 %v257
        %v465 = vunpack.c.l.b16 %v258
        %v466 = vunpack.c.h.b16 %v258
        %v467 = vunpack.c.l.b16 %v259
        %v468 = vunpack.c.h.b16 %v259
        %v469 = vunpack.c.l.b16 %v260
        %v470 = vunpack.c.h.b16 %v260
        %v471 = vunpack.c.l.b16 %v261
        %v472 = vunpack.c.h.b16 %v261
        %v473 = vunpack.c.l.b16 %v262
        %v474 = vunpack.c.h.b16 %v262
        %v475 = vunpack.c.l.b16 %v263
        %v476 = vunpack.c.h.b16 %v263
        %v477 = vunpack.c.l.b16 %v264
        %v478 = vunpack.c.h.b16 %v264
        %v479 = vunpack.c.l.b16 %v265
        %v480 = vunpack.c.h.b16 %v265
        %v481 = vunpack.c.l.b16 %v266
        %v482 = vunpack.c.h.b16 %v266
        %v483 = vpack.c.b16 %v359, %v355
        %v484 = vpack.c.b16 %v360, %v356
        %v485 = vpack.c.b16 %v361, %v357
        %v486 = vpack.c.b16 %v362, %v358
        %v487 = vpack.c.b16 %v367, %v363
        %v488 = vpack.c.b16 %v368, %v364
        %v489 = vpack.c.b16 %v369, %v365
        %v490 = vpack.c.b16 %v370, %v366
        %v491 = vpack.c.b16 %v375, %v371
        %v492 = vpack.c.b16 %v376, %v372
        %v493 = vpack.c.b16 %v377, %v373
        %v494 = vpack.c.b16 %v378, %v374
        %v495 = vpack.c.b16 %v383, %v379
        %v496 = vpack.c.b16 %v384, %v380
        %v497 = vpack.c.b16 %v385, %v381
        %v498 = vpack.c.b16 %v386, %v382
        %v499 = vpack.c.b16 %v391, %v387
        %v500 = vpack.c.b16 %v392, %v388
        %v501 = vpack.c.b16 %v393, %v389
        %v502 = vpack.c.b16 %v394, %v390
        %v503 = vpack.c.b16 %v399, %v395
        %v504 = vpack.c.b16 %v400, %v396
        %v505 = vpack.c.b16 %v401, %v397
        %v506 = vpack.c.b16 %v402, %v398
        %v507 = vpack.c.b16 %v407, %v403
        %v508 = vpack.c.b16 %v408, %v404
        %v509 = vpack.c.b16 %v409, %v405
        %v510 = vpack.c.b16 %v410, %v406
        %v511 = vpack.c.b16 %v415, %v411
        %v512 = vpack.c.b16 %v416, %v412
        %v513 = vpack.c.b16 %v417, %v413
        %v514 = vpack.c.b16 %v418, %v414
        %v515 = vpack.c.b16 %v423, %v419
        %v516 = vpack.c.b16 %v424, %v420
        %v517 = vpack.c.b16 %v425, %v421
        %v518 = vpack.c.b16 %v426, %v422
        %v519 = vpack.c.b16 %v431, %v427
        %v520 = vpack.c.b16 %v432, %v428
        %v521 = vpack.c.b16 %v433, %v429
        %v522 = vpack.c.b16 %v434, %v430
        %v523 = vpack.c.b16 %v439, %v435
        %v524 = vpack.c.b16 %v440, %v436
        %v525 = vpack.c.b16 %v441, %v437
        %v526 = vpack.c.b16 %v442, %v438
        %v527 = vpack.c.b16 %v447, %v443
        %v528 = vpack.c.b16 %v448, %v444
        %v529 = vpack.c.b16 %v449, %v445
        %v530 = vpack.c.b16 %v450, %v446
        %v531 = vpack.c.b16 %v455, %v451
        %v532 = vpack.c.b16 %v456, %v452
        %v533 = vpack.c.b16 %v457, %v453
        %v534 = vpack.c.b16 %v458, %v454
        %v535 = vpack.c.b16 %v463, %v459
        %v536 = vpack.c.b16 %v464, %v460
        %v537 = vpack.c.b16 %v465, %v461
        %v538 = vpack.c.b16 %v466, %v462
        %v539 = vpack.c.b16 %v471, %v467
        %v540 = vpack.c.b16 %v472, %v468
        %v541 = vpack.c.b16 %v473, %v469
        %v542 = vpack.c.b16 %v474, %v470
        %v543 = vpack.c.b16 %v479, %v475
        %v544 = vpack.c.b16 %v480, %v476
        %v545 = vpack.c.b16 %v481, %v477
        %v546 = vpack.c.b16 %v482, %v478
        %611 = vmatprep.subr.bf16.mxu0 %v484
        %612 = vmatpush1.bf16.msra.mxu0 %v483
        %613 = vmatprep.subr.bf16.mxu0 %v488
        %614 = vmatpush1.bf16.msra.mxu0 %v487
        %615 = vmatprep.subr.bf16.mxu0 %v492
        %616 = vmatpush1.bf16.msra.mxu0 %v491
        %617 = vmatprep.subr.bf16.mxu0 %v496
        %618 = vmatpush1.bf16.msra.mxu0 %v495
        %619 = vmatprep.subr.bf16.mxu0 %v500
        %620 = vmatpush1.bf16.msra.mxu0 %v499
        %621 = vmatprep.subr.bf16.mxu0 %v504
        %622 = vmatpush1.bf16.msra.mxu0 %v503
        %623 = vmatprep.subr.bf16.mxu0 %v508
        %624 = vmatpush1.bf16.msra.mxu0 %v507
        %625 = vmatprep.subr.bf16.mxu0 %v512
        %626 = vmatpush1.bf16.msra.mxu0 %v511
        %627 = vmatprep.subr.bf16.mxu0 %v516
        %628 = vmatpush1.bf16.msra.mxu0 %v515
        %629 = vmatprep.subr.bf16.mxu0 %v520
        %630 = vmatpush1.bf16.msra.mxu0 %v519
        %631 = vmatprep.subr.bf16.mxu0 %v524
        %632 = vmatpush1.bf16.msra.mxu0 %v523
        %633 = vmatprep.subr.bf16.mxu0 %v528
        %634 = vmatpush1.bf16.msra.mxu0 %v527
        %635 = vmatprep.subr.bf16.mxu0 %v532
        %636 = vmatpush1.bf16.msra.mxu0 %v531
        %637 = vmatprep.subr.bf16.mxu0 %v536
        %638 = vmatpush1.bf16.msra.mxu0 %v535
        %639 = vmatprep.subr.bf16.mxu0 %v540
        %640 = vmatpush1.bf16.msra.mxu0 %v539
        %641 = vmatprep.subr.bf16.mxu0 %v544
        %642 = vmatpush1.bf16.msra.mxu0 %v543
        %643 = vmatprep.mubr.bf16.mxu0 %v269
        %644 = vmatmul.mubr.bf16.gmra.mrb[0].mxu0 %v268
        %v645 = vpop.f32.mrb[0].mxu0
        %v646 = vadd.f32 %v274, %v645
        %v647 = vpop.f32.mrb[0].mxu0
        %v648 = vadd.f32 %v278, %v647
        %v649 = vpop.f32.mrb[0].mxu0
        %v650 = vpop.f32.mrb[0].mxu0
        %651 = vdwg.mxu0
        %652 = vmatprep.subr.bf16.mxu0 %v486
        %653 = vmatpush1.bf16.msra.mxu0 %v485
        %654 = vmatprep.subr.bf16.mxu0 %v490
        %655 = vmatpush1.bf16.msra.mxu0 %v489
        %656 = vmatprep.subr.bf16.mxu0 %v494
        %657 = vmatpush1.bf16.msra.mxu0 %v493
        %658 = vmatprep.subr.bf16.mxu0 %v498
        %659 = vmatpush1.bf16.msra.mxu0 %v497
        %660 = vmatprep.subr.bf16.mxu0 %v502
        %661 = vmatpush1.bf16.msra.mxu0 %v501
        %662 = vmatprep.subr.bf16.mxu0 %v506
        %663 = vmatpush1.bf16.msra.mxu0 %v505
        %664 = vmatprep.subr.bf16.mxu0 %v510
        %665 = vmatpush1.bf16.msra.mxu0 %v509
        %666 = vmatprep.subr.bf16.mxu0 %v514
        %667 = vmatpush1.bf16.msra.mxu0 %v513
        %668 = vmatprep.subr.bf16.mxu0 %v518
        %669 = vmatpush1.bf16.msra.mxu0 %v517
        %670 = vmatprep.subr.bf16.mxu0 %v522
        %671 = vmatpush1.bf16.msra.mxu0 %v521
        %672 = vmatprep.subr.bf16.mxu0 %v526
        %673 = vmatpush1.bf16.msra.mxu0 %v525
        %674 = vmatprep.subr.bf16.mxu0 %v530
        %675 = vmatpush1.bf16.msra.mxu0 %v529
        %676 = vmatprep.subr.bf16.mxu0 %v534
        %677 = vmatpush1.bf16.msra.mxu0 %v533
        %678 = vmatprep.subr.bf16.mxu0 %v538
        %679 = vmatpush1.bf16.msra.mxu0 %v537
        %680 = vmatprep.subr.bf16.mxu0 %v542
        %681 = vmatpush1.bf16.msra.mxu0 %v541
        %682 = vmatprep.subr.bf16.mxu0 %v546
        %683 = vmatpush1.bf16.msra.mxu0 %v545
        %684 = vmatprep.mubr.bf16.mxu0 %v269
        %685 = vmatmul.mubr.bf16.gmra.mrb[0].mxu0 %v268
        %v686 = vpop.f32.mrb[0].mxu0
        %v687 = vadd.f32 %v282, %v686
        %v688 = vpop.f32.mrb[0].mxu0
        %v689 = vadd.f32 %v286, %v688
        %v690 = vpop.f32.mrb[0].mxu0
        %v691 = vpop.f32.mrb[0].mxu0
        %692 = vdwg.mxu0
        %v693 = vxor.u32 %v646, 2147483648
        %v694 = vmul.f32 %v693, 1.442695
        %v695 = vpow.pop %v694
        %v696 = vadd.f32 %v695, 1.0
        %v697 = vrcp.pop %v696
        %v698 = vmul.f32 1.0, %v697
        %v699 = vxor.u32 %v648, 2147483648
        %v700 = vmul.f32 %v699, 1.442695
        %v701 = vpow.pop %v700
        %v702 = vadd.f32 %v701, 1.0
        %v703 = vrcp.pop %v702
        %v704 = vmul.f32 1.0, %v703
        %v705 = vmul.f32 %v698, %v689
        %v706 = vadd.f32 %v687, %v705
        %v707 = vtanh.pop %v706
        %v708 = vsub.f32 1.0, %v704
        %v709 = vmul.f32 %v708, %v707
        %v710 = vmul.f32 %v704, %v202
        %v711 = vadd.f32 %v709, %v710
        %712 = vst [vmem:[#allocation2] sm:$0x3] %v711
        %v713 = vld [vmem:[%s1] sm:$0x3]
        %v714 = vstv %s16
        %vm715 = vcmp.eq.s32.totalorder %v713, %v714
        %v716 = vld [vmem:[%s4] sm:$0x3]
        %v717 = vsel %vm715, 1, 0
        %718 = vset.pattern.permute.xlu0 0
        %719 = vperm.xlu0 %718, %v717
        %v720 = vpop.permute.xlu0 %719
        %vm721 = vcmp.eq.s32.totalorder %v720, 1
        %v722 = vsel %vm721, %v711, %v716
        %723 = vst [vmem:[%s4] sm:$0x3] %v722
        // Predicated region
        $region45: #{seq2seq_forward.2} parent=35 // pred_check
          %p724 = pneg %p118
        $region46: #{seq2seq_forward.2} parent=35 // pred_check_branch
          %726 = sbr.rel (%p724) target = $region48
        $region47: #{seq2seq_forward.2} parent=35 // pred_region
          _
        $region48: #{seq2seq_forward.2} parent=35 // pred_fallthru
          _
        // Predicated region
        $region49: #{seq2seq_forward.2} parent=35 // pred_check
          %p727 = pneg %p118
        $region50: #{seq2seq_forward.2} parent=35 // pred_check_branch
          %729 = sbr.rel (%p727) target = $region52
        $region51: #{seq2seq_forward.2} parent=35 // pred_region
          _
        $region52: #{seq2seq_forward.2} parent=35 // pred_fallthru
          _
      $region36: #{seq2seq_forward.2} parent=5 // pred_fallthru
        _
      %p730 = scmp.le.s32.totalorder 2, %s11
      // Predicated region
      $region53: #{seq2seq_forward.2} parent=5 // pred_check
        %p731 = pneg %p730
      $region54: #{seq2seq_forward.2} parent=5 // pred_check_branch
        %733 = sbr.rel (%p731) target = $region56
      $region55: #{seq2seq_forward.2} parent=5 // pred_region
        %s734 = ssub.s32 %s11, 2
      $region56: #{seq2seq_forward.2} parent=5 // pred_fallthru
        _
    $region6: #{seq2seq_forward.2} parent=1 // loop_footer
      %s15 = sadd.s32 1, %s11
    $region7: #{seq2seq_forward.2} parent=1 // loop_footer_branch
      %10 = sbr.rel target = $region3
    $region8: #{seq2seq_forward.2} parent=1 // loop_exit
      _
    %735 = vsyncpa [#allocation4], 1
    %s736 = scalar_lea.sflag [#allocation4], 1
    %737 = vsyncpa %s736, 1

// kernel: seq2seq_forward.3
$region0: #{seq2seq_forward.3}
  #allocation0 [shape = 'u32[]', space=smem, size = 0x4, offset = 0x4, fixed_abs, tag = 'smem constant byte address 0x4 - core index']
  #allocation1 [shape = 'u32[144,128]{1,0:T(1,128)}', space=vmem, size = 0x12000, scoped, tag = 'internal scratch']
  #allocation2 [shape = 'f32[2,128]{1,0:T(2,128)}', space=vmem, size = 0x400, scoped, tag = 'scratch operand']
  #allocation3 [shape = 'f32[2,128]{1,0:T(2,128)}', space=vmem, size = 0x400, scoped, tag = 'scratch operand']
  %s0 = inlined_call_operand.vmem [shape: f32[2,128], index: 0, kind: input, shape index: {}]
  %s1 = inlined_call_operand.vmem [shape: bf16[128,128], index: 1, kind: input, shape index: {}]
  %s2 = inlined_call_operand.vmem [shape: bf16[256,512], index: 2, kind: input, shape index: {}]
  %s3 = inlined_call_operand.vmem [shape: f32[1,512], index: 3, kind: input, shape index: {}]
  %s4 = inlined_call_operand.vmem [shape: bf16[128,128], index: 4, kind: input, shape index: {}]
  %s5 = inlined_call_operand.vmem [shape: f32[1,128], index: 5, kind: input, shape index: {}]
  %s6 = inlined_call_operand.hbm [shape: f32[6,2,128], index: 6, kind: output, shape index: {}]
  %s7 = sld [smem:[#allocation0]]
  $region61: #{seq2seq_forward.3} parent=0
    _
  %s9 = ssub.s32 1, %s7
  %s10 = scalar_select 0, %s9, %s7
  $region1: #{seq2seq_forward.3} parent=0
    #allocation4 [shape = 'u8[2048]{0}', space=vmem, size = 0x800, scoped, tag = 'output window, operand 0']
    #allocation5 [shape = 's32[2]{0}', space=sflag, size = 0x8, scoped, tag = 'scoped memory for seq2seq_forward.3']
    %11 = vsyncpa [#allocation5], 0
    %s12 = scalar_lea.sflag [#allocation5], 1
    %13 = vsyncpa %s12, 0
    loop: start=0, step=1, limit=8
    $region2: #{seq2seq_forward.3} parent=1 // loop_pre_header
      _
    $region3: #{seq2seq_forward.3} parent=1 // loop_header
      %s15 = sphi 0, %s19
      %p16 = scmp.ge.s32.totalorder %s15, 8
      %s23 = sphi 0, %s23
      %s25 = sphi 0, %s23
      %s26 = sphi 0, %s25
      %s40 = sphi 0, %s26
      %s44 = sphi 0, %s44
      %s46 = sphi 0, %s44
      %s47 = sphi 0, %s46
      %s61 = sphi 0, %s47
      %s65 = sphi 0, %s65
      %s67 = sphi 0, %s65
      %s68 = sphi 0, %s67
      %s82 = sphi 0, %s68
      %s86 = sphi 0, %s86
      %s88 = sphi 0, %s86
      %s89 = sphi 0, %s88
      %s103 = sphi 0, %s89
      %s107 = sphi 0, %s107
      %s109 = sphi 0, %s107
      %s110 = sphi 0, %s109
      %s124 = sphi 0, %s110
      %s128 = sphi 0, %s128
      %s130 = sphi 0, %s128
      %s131 = sphi 0, %s130
      %s145 = sphi 0, %s131
      %s151 = sphi 0, %s153
      %s154 = sphi 0, %s151
      %s155 = sphi 0, %s154
      %s171 = sphi 0, %s155
    $region4: #{seq2seq_forward.3} parent=1 // loop_header_branch
      %18 = sbr.rel (%p16) target = $region8
    $region5: #{seq2seq_forward.3} parent=1 // loop_body
      %s20 = ssub.s32 %s15, 1
      %s21 = ssub.s32 %s15, 2
      %s22 = sadd.s32 %s15, 1
      %s24 = sadd.s32 %s23, 1
      %p27 = scmp.eq.s32.totalorder %s15, 5
      %p28 = scmp.ne.s32.totalorder %s23, %s25
      %p29 = scmp.eq.s32.totalorder %s15, 0
      %p30 = por %p28, %p29
      %p31 = scmp.ne.s32.totalorder %s23, %s25
      %p32 = scmp.eq.s32.totalorder %s20, 5
      %p33 = por %p31, %p32
      %p34 = scmp.ne.s32.totalorder %s25, %s26
      %p35 = scmp.eq.s32.totalorder %s20, 0
      %p36 = por %p34, %p35
      %p37 = scmp.ne.s32.totalorder %s25, %s26
      %p38 = scmp.eq.s32.totalorder %s21, 5
      %p39 = por %p37, %p38
      %p41 = scmp.ne.s32.totalorder %s26, %s40
      %p42 = scmp.eq.s32.totalorder %s21, 0
      %p43 = por %p41, %p42
      %s45 = sadd.s32 %s44, 1
      %p48 = scmp.eq.s32.totalorder %s15, 5
      %p49 = scmp.ne.s32.totalorder %s44, %s46
      %p50 = scmp.eq.s32.totalorder %s15, 0
      %p51 = por %p49, %p50
      %p52 = scmp.ne.s32.totalorder %s44, %s46
      %p53 = scmp.eq.s32.totalorder %s20, 5
      %p54 = por %p52, %p53
      %p55 = scmp.ne.s32.totalorder %s46, %s47
      %p56 = scmp.eq.s32.totalorder %s20, 0
      %p57 = por %p55, %p56
      %p58 = scmp.ne.s32.totalorder %s46, %s47
      %p59 = scmp.eq.s32.totalorder %s21, 5
      %p60 = por %p58, %p59
      %p62 = scmp.ne.s32.totalorder %s47, %s61
      %p63 = scmp.eq.s32.totalorder %s21, 0
      %p64 = por %p62, %p63
      %s66 = sadd.s32 %s65, 1
      %p69 = scmp.eq.s32.totalorder %s15, 5
      %p70 = scmp.ne.s32.totalorder %s65, %s67
      %p71 = scmp.eq.s32.totalorder %s15, 0
      %p72 = por %p70, %p71
      %p73 = scmp.ne.s32.totalorder %s65, %s67
      %p74 = scmp.eq.s32.totalorder %s20, 5
      %p75 = por %p73, %p74
      %p76 = scmp.ne.s32.totalorder %s67, %s68
      %p77 = scmp.eq.s32.totalorder %s20, 0
      %p78 = por %p76, %p77
      %p79 = scmp.ne.s32.totalorder %s67, %s68
      %p80 = scmp.eq.s32.totalorder %s21, 5
      %p81 = por %p79, %p80
      %p83 = scmp.ne.s32.totalorder %s68, %s82
      %p84 = scmp.eq.s32.totalorder %s21, 0
      %p85 = por %p83, %p84
      %s87 = sadd.s32 %s86, 1
      %p90 = scmp.eq.s32.totalorder %s15, 5
      %p91 = scmp.ne.s32.totalorder %s86, %s88
      %p92 = scmp.eq.s32.totalorder %s15, 0
      %p93 = por %p91, %p92
      %p94 = scmp.ne.s32.totalorder %s86, %s88
      %p95 = scmp.eq.s32.totalorder %s20, 5
      %p96 = por %p94, %p95
      %p97 = scmp.ne.s32.totalorder %s88, %s89
      %p98 = scmp.eq.s32.totalorder %s20, 0
      %p99 = por %p97, %p98
      %p100 = scmp.ne.s32.totalorder %s88, %s89
      %p101 = scmp.eq.s32.totalorder %s21, 5
      %p102 = por %p100, %p101
      %p104 = scmp.ne.s32.totalorder %s89, %s103
      %p105 = scmp.eq.s32.totalorder %s21, 0
      %p106 = por %p104, %p105
      %s108 = sadd.s32 %s107, 1
      %p111 = scmp.eq.s32.totalorder %s15, 5
      %p112 = scmp.ne.s32.totalorder %s107, %s109
      %p113 = scmp.eq.s32.totalorder %s15, 0
      %p114 = por %p112, %p113
      %p115 = scmp.ne.s32.totalorder %s107, %s109
      %p116 = scmp.eq.s32.totalorder %s20, 5
      %p117 = por %p115, %p116
      %p118 = scmp.ne.s32.totalorder %s109, %s110
      %p119 = scmp.eq.s32.totalorder %s20, 0
      %p120 = por %p118, %p119
      %p121 = scmp.ne.s32.totalorder %s109, %s110
      %p122 = scmp.eq.s32.totalorder %s21, 5
      %p123 = por %p121, %p122
      %p125 = scmp.ne.s32.totalorder %s110, %s124
      %p126 = scmp.eq.s32.totalorder %s21, 0
      %p127 = por %p125, %p126
      %s129 = sadd.s32 %s128, 1
      %p132 = scmp.eq.s32.totalorder %s15, 5
      %p133 = scmp.ne.s32.totalorder %s128, %s130
      %p134 = scmp.eq.s32.totalorder %s15, 0
      %p135 = por %p133, %p134
      %p136 = scmp.ne.s32.totalorder %s128, %s130
      %p137 = scmp.eq.s32.totalorder %s20, 5
      %p138 = por %p136, %p137
      %p139 = scmp.ne.s32.totalorder %s130, %s131
      %p140 = scmp.eq.s32.totalorder %s20, 0
      %p141 = por %p139, %p140
      %p142 = scmp.ne.s32.totalorder %s130, %s131
      %p143 = scmp.eq.s32.totalorder %s21, 5
      %p144 = por %p142, %p143
      %p146 = scmp.ne.s32.totalorder %s131, %s145
      %p147 = scmp.eq.s32.totalorder %s21, 0
      %p148 = por %p146, %p147
      %s149 = ssub.s32 %s15, %s22
      %p150 = scmp.eq.s32.totalorder %s149, 0
      %s152 = sadd.s32 %s151, 1
      %s153 = scalar_select %p150, %s151, %s152
      %p156 = pneg %p150
      %p157 = scmp.eq.s32.totalorder %s15, 5
      %p158 = por %p156, %p157
      %p159 = scmp.ne.s32.totalorder %s151, %s154
      %p160 = scmp.eq.s32.totalorder %s15, 0
      %p161 = por %p159, %p160
      %p162 = scmp.ne.s32.totalorder %s151, %s154
      %p163 = scmp.eq.s32.totalorder %s20, 5
      %p164 = por %p162, %p163
      %p165 = scmp.ne.s32.totalorder %s154, %s155
      %p166 = scmp.eq.s32.totalorder %s20, 0
      %p167 = por %p165, %p166
      %p168 = scmp.ne.s32.totalorder %s154, %s155
      %p169 = scmp.eq.s32.totalorder %s21, 5
      %p170 = por %p168, %p169
      %p172 = scmp.ne.s32.totalorder %s155, %s171
      %p173 = scmp.eq.s32.totalorder %s21, 0
      %p174 = por %p172, %p173
      %p175 = scmp.le.s32.totalorder 1, %s15
      %p176 = scmp.lt.s32.totalorder %s15, 7
      %p177 = pnand %p175, %p176
      %p178 = pneg %p177
      // Predicated region
      $region9: #{seq2seq_forward.3} parent=5 // pred_check
        _
      $region10: #{seq2seq_forward.3} parent=5 // pred_check_branch
        %180 = sbr.rel (%p177) target = $region12
      $region11: #{seq2seq_forward.3} parent=5 // pred_region
        %s181 = ssub.s32 %s15, 1
        // Predicated region
        $region13: #{seq2seq_forward.3} parent=11 // pred_check
          %p182 = pneg %p36
        $region14: #{seq2seq_forward.3} parent=11 // pred_check_branch
          %184 = sbr.rel (%p182) target = $region16
        $region15: #{seq2seq_forward.3} parent=11 // pred_region
          _
        $region16: #{seq2seq_forward.3} parent=11 // pred_fallthru
          _
        // Predicated region
        $region17: #{seq2seq_forward.3} parent=11 // pred_check
          %p185 = pneg %p57
        $region18: #{seq2seq_forward.3} parent=11 // pred_check_branch
          %187 = sbr.rel (%p185) target = $region20
        $region19: #{seq2seq_forward.3} parent=11 // pred_region
          _
        $region20: #{seq2seq_forward.3} parent=11 // pred_fallthru
          _
        // Predicated region
        $region21: #{seq2seq_forward.3} parent=11 // pred_check
          %p188 = pneg %p78
        $region22: #{seq2seq_forward.3} parent=11 // pred_check_branch
          %190 = sbr.rel (%p188) target = $region24
        $region23: #{seq2seq_forward.3} parent=11 // pred_region
          _
        $region24: #{seq2seq_forward.3} parent=11 // pred_fallthru
          _
        // Predicated region
        $region25: #{seq2seq_forward.3} parent=11 // pred_check
          %p191 = pneg %p99
        $region26: #{seq2seq_forward.3} parent=11 // pred_check_branch
          %193 = sbr.rel (%p191) target = $region28
        $region27: #{seq2seq_forward.3} parent=11 // pred_region
          _
        $region28: #{seq2seq_forward.3} parent=11 // pred_fallthru
          _
        // Predicated region
        $region29: #{seq2seq_forward.3} parent=11 // pred_check
          %p194 = pneg %p120
        $region30: #{seq2seq_forward.3} parent=11 // pred_check_branch
          %196 = sbr.rel (%p194) target = $region32
        $region31: #{seq2seq_forward.3} parent=11 // pred_region
          _
        $region32: #{seq2seq_forward.3} parent=11 // pred_fallthru
          _
        // Predicated region
        $region33: #{seq2seq_forward.3} parent=11 // pred_check
          %p197 = pneg %p141
        $region34: #{seq2seq_forward.3} parent=11 // pred_check_branch
          %199 = sbr.rel (%p197) target = $region36
        $region35: #{seq2seq_forward.3} parent=11 // pred_region
          _
        $region36: #{seq2seq_forward.3} parent=11 // pred_fallthru
          _
      $region12: #{seq2seq_forward.3} parent=5 // pred_fallthru
        _
      %p200 = scmp.lt.s32.totalorder %s15, 6
      // Predicated region
      $region37: #{seq2seq_forward.3} parent=5 // pred_check
        %p201 = pneg %p200
      $region38: #{seq2seq_forward.3} parent=5 // pred_check_branch
        %203 = sbr.rel (%p201) target = $region40
      $region39: #{seq2seq_forward.3} parent=5 // pred_region
        _
      $region40: #{seq2seq_forward.3} parent=5 // pred_fallthru
        _
      %p204 = scmp.le.s32.totalorder 1, %s15
      %p205 = scmp.lt.s32.totalorder %s15, 7
      %p206 = pnand %p204, %p205
      %p207 = pneg %p206
      // Predicated region
      $region41: #{seq2seq_forward.3} parent=5 // pred_check
        _
      $region42: #{seq2seq_forward.3} parent=5 // pred_check_branch
        %209 = sbr.rel (%p206) target = $region44
      $region43: #{seq2seq_forward.3} parent=5 // pred_region
        %s210 = ssub.s32 %s15, 1
        %p211 = pneg %p36
        %p212 = pneg %p33
        %p213 = pneg %p57
        %p214 = pneg %p54
        %p215 = pneg %p78
        %p216 = pneg %p75
        %p217 = pneg %p99
        %p218 = pneg %p96
        %p219 = pneg %p120
        %p220 = pneg %p117
        %p221 = pneg %p141
        %p222 = pneg %p138
        %p223 = pneg %p167
        %p224 = pneg %p164
        %s225 = sand.u32 %s154, 1
        %s226 = scalar_lea.sflag [#allocation5], %s225
        %s227 = sand.u32 %s154, 1
        %s228 = smul.addr %s227, 2
        %s229 = scalar_lea.vmem [#allocation4], %s228
        %p231 = scmp.eq.s32.totalorder %s20, 0
        // Predicated region
        $region45: #{seq2seq_forward.3} parent=43 // pred_check
          %p232 = pneg %p231
        $region46: #{seq2seq_forward.3} parent=43 // pred_check_branch
          %234 = sbr.rel (%p232) target = $region48
        $region47: #{seq2seq_forward.3} parent=43 // pred_region
          %v235 = vld [vmem:[%s0] sm:$0x3]
          %236 = vst [vmem:[#allocation2] sm:$0x3] %v235
          %v237 = vlaneseq
          %v238 = vand.u32 %v237, 127
          %vm239 = vcmp.eq.s32.totalorder %v238, 0
          %v240 = vsel %vm239, 1, 0
          %v241 = vcvt.s32.f32 %v240
          %242 = vst [vmem:[#allocation3] sm:$0x3] %v241
        $region48: #{seq2seq_forward.3} parent=43 // pred_fallthru
          _
        %v243 = vld [vmem:[#allocation3] sm:$0x3]
        %v244 = vpack.c.bf16 %v243, %v243
        %v245 = vld [vmem:[%s1] sm:$0xf]
        %v246 = vld [vmem:[%s1 + $0x4] sm:$0xf]
        %v247 = vld [vmem:[%s1 + $0x8] sm:$0xf]
        %v248 = vld [vmem:[%s1 + $0xc] sm:$0xf]
        %v249 = vld [vmem:[%s1 + $0x10] sm:$0xf]
        %v250 = vld [vmem:[%s1 + $0x14] sm:$0xf]
        %v251 = vld [vmem:[%s1 + $0x18] sm:$0xf]
        %v252 = vld [vmem:[%s1 + $0x1c] sm:$0xf]
        %v253 = vld [vmem:[%s1 + $0x20] sm:$0xf]
        %v254 = vld [vmem:[%s1 + $0x24] sm:$0xf]
        %v255 = vld [vmem:[%s1 + $0x28] sm:$0xf]
        %v256 = vld [vmem:[%s1 + $0x2c] sm:$0xf]
        %v257 = vld [vmem:[%s1 + $0x30] sm:$0xf]
        %v258 = vld [vmem:[%s1 + $0x34] sm:$0xf]
        %v259 = vld [vmem:[%s1 + $0x38] sm:$0xf]
        %v260 = vld [vmem:[%s1 + $0x3c] sm:$0xf]
        %v277 = vunpack.c.l.b16 %v245
        %v278 = vunpack.c.l.b16 %v246
        %v279 = vunpack.c.l.b16 %v247
        %v280 = vunpack.c.l.b16 %v248
        %v281 = vunpack.c.l.b16 %v249
        %v282 = vunpack.c.l.b16 %v250
        %v283 = vunpack.c.l.b16 %v251
        %v284 = vunpack.c.l.b16 %v252
        %v285 = vunpack.c.l.b16 %v253
        %v286 = vunpack.c.l.b16 %v254
        %v287 = vunpack.c.l.b16 %v255
        %v288 = vunpack.c.l.b16 %v256
        %v289 = vunpack.c.l.b16 %v257
        %v290 = vunpack.c.l.b16 %v258
        %v291 = vunpack.c.l.b16 %v259
        %v292 = vunpack.c.l.b16 %v260
        %v293 = vpack.c.b16 %v278, %v277
        %v294 = vpack.c.b16 %v280, %v279
        %v295 = vpack.c.b16 %v282, %v281
        %v296 = vpack.c.b16 %v284, %v283
        %v297 = vpack.c.b16 %v286, %v285
        %v298 = vpack.c.b16 %v288, %v287
        %v299 = vpack.c.b16 %v290, %v289
        %v300 = vpack.c.b16 %v292, %v291
        %309 = vmatprep.subr.bf16.mxu0 0
        %310 = vmatpush1.bf16.msra.mxu0 %v293
        %311 = vmatprep.subr.bf16.mxu0 0
        %312 = vmatpush1.bf16.msra.mxu0 %v294
        %313 = vmatprep.subr.bf16.mxu0 0
        %314 = vmatpush1.bf16.msra.mxu0 %v295
        %315 = vmatprep.subr.bf16.mxu0 0
        %316 = vmatpush1.bf16.msra.mxu0 %v296
        %317 = vmatprep.subr.bf16.mxu0 0
        %318 = vmatpush1.bf16.msra.mxu0 %v297
        %319 = vmatprep.subr.bf16.mxu0 0
        %320 = vmatpush1.bf16.msra.mxu0 %v298
        %321 = vmatprep.subr.bf16.mxu0 0
        %322 = vmatpush1.bf16.msra.mxu0 %v299
        %323 = vmatprep.subr.bf16.mxu0 0
        %324 = vmatpush1.bf16.msra.mxu0 %v300
        %325 = vmatprep.subr.bf16.mxu0 0
        %326 = vmatpush1.bf16.msra.mxu0 0
        %327 = vmatprep.subr.bf16.mxu0 0
        %328 = vmatpush1.bf16.msra.mxu0 0
        %329 = vmatprep.subr.bf16.mxu0 0
        %330 = vmatpush1.bf16.msra.mxu0 0
        %331 = vmatprep.subr.bf16.mxu0 0
        %332 = vmatpush1.bf16.msra.mxu0 0
        %333 = vmatprep.subr.bf16.mxu0 0
        %334 = vmatpush1.bf16.msra.mxu0 0
        %335 = vmatprep.subr.bf16.mxu0 0
        %336 = vmatpush1.bf16.msra.mxu0 0
        %337 = vmatprep.subr.bf16.mxu0 0
        %338 = vmatpush1.bf16.msra.mxu0 0
        %339 = vmatprep.subr.bf16.mxu0 0
        %340 = vmatpush1.bf16.msra.mxu0 0
        %341 = vmatprep.mubr.bf16.mxu0 0
        %342 = vmatmul.mubr.bf16.gmra.mrb[0].mxu0 %v244
        %v343 = vpop.f32.mrb[0].mxu0
        %v344 = vadd.f32 0.0, %v343
        %v345 = vpop.f32.mrb[0].mxu0
        %v346 = vpop.f32.mrb[0].mxu0
        %v347 = vpop.f32.mrb[0].mxu0
        %348 = vdwg.mxu0
        %v349 = vld [vmem:[#allocation2] sm:$0x3]
        %v350 = vld [vmem:[%s2] sm:$0xff]
        %v351 = vld [vmem:[%s2 + $0x8] sm:$0xff]
        %v352 = vld [vmem:[%s2 + $0x10] sm:$0xff]
        %v353 = vld [vmem:[%s2 + $0x18] sm:$0xff]
        %v354 = vld [vmem:[%s2 + $0x20] sm:$0xff]
        %v355 = vld [vmem:[%s2 + $0x28] sm:$0xff]
        %v356 = vld [vmem:[%s2 + $0x30] sm:$0xff]
        %v357 = vld [vmem:[%s2 + $0x38] sm:$0xff]
        %v358 = vld [vmem:[%s2 + $0x40] sm:$0xff]
        %v359 = vld [vmem:[%s2 + $0x48] sm:$0xff]
        %v360 = vld [vmem:[%s2 + $0x50] sm:$0xff]
        %v361 = vld [vmem:[%s2 + $0x58] sm:$0xff]
        %v362 = vld [vmem:[%s2 + $0x60] sm:$0xff]
        %v363 = vld [vmem:[%s2 + $0x68] sm:$0xff]
        %v364 = vld [vmem:[%s2 + $0x70] sm:$0xff]
        %v365 = vld [vmem:[%s2 + $0x78] sm:$0xff]
        %v366 = vld [vmem:[%s2 + $0x80] sm:$0xff]
        %v367 = vld [vmem:[%s2 + $0x88] sm:$0xff]
        %v368 = vld [vmem:[%s2 + $0x90] sm:$0xff]
        %v369 = vld [vmem:[%s2 + $0x98] sm:$0xff]
        %v370 = vld [vmem:[%s2 + $0xa0] sm:$0xff]
        %v371 = vld [vmem:[%s2 + $0xa8] sm:$0xff]
        %v372 = vld [vmem:[%s2 + $0xb0] sm:$0xff]
        %v373 = vld [vmem:[%s2 + $0xb8] sm:$0xff]
        %v374 = vld [vmem:[%s2 + $0xc0] sm:$0xff]
        %v375 = vld [vmem:[%s2 + $0xc8] sm:$0xff]
        %v376 = vld [vmem:[%s2 + $0xd0] sm:$0xff]
        %v377 = vld [vmem:[%s2 + $0xd8] sm:$0xff]
        %v378 = vld [vmem:[%s2 + $0xe0] sm:$0xff]
        %v379 = vld [vmem:[%s2 + $0xe8] sm:$0xff]
        %v380 = vld [vmem:[%s2 + $0xf0] sm:$0xff]
        %v381 = vld [vmem:[%s2 + $0xf8] sm:$0xff]
        %v382 = vld [vmem:[%s2 + $0x100] sm:$0xff]
        %v383 = vld [vmem:[%s2 + $0x108] sm:$0xff]
        %v384 = vld [vmem:[%s2 + $0x110] sm:$0xff]
        %v385 = vld [vmem:[%s2 + $0x118] sm:$0xff]
        %v386 = vld [vmem:[%s2 + $0x120] sm:$0xff]
        %v387 = vld [vmem:[%s2 + $0x128] sm:$0xff]
        %v388 = vld [vmem:[%s2 + $0x130] sm:$0xff]
        %v389 = vld [vmem:[%s2 + $0x138] sm:$0xff]
        %v390 = vld [vmem:[%s2 + $0x140] sm:$0xff]
        %v391 = vld [vmem:[%s2 + $0x148] sm:$0xff]
        %v392 = vld [vmem:[%s2 + $0x150] sm:$0xff]
        %v393 = vld [vmem:[%s2 + $0x158] sm:$0xff]
        %v394 = vld [vmem:[%s2 + $0x160] sm:$0xff]
        %v395 = vld [vmem:[%s2 + $0x168] sm:$0xff]
        %v396 = vld [vmem:[%s2 + $0x170] sm:$0xff]
        %v397 = vld [vmem:[%s2 + $0x178] sm:$0xff]
        %v398 = vld [vmem:[%s2 + $0x180] sm:$0xff]
        %v399 = vld [vmem:[%s2 + $0x188] sm:$0xff]
        %v400 = vld [vmem:[%s2 + $0x190] sm:$0xff]
        %v401 = vld [vmem:[%s2 + $0x198] sm:$0xff]
        %v402 = vld [vmem:[%s2 + $0x1a0] sm:$0xff]
        %v403 = vld [vmem:[%s2 + $0x1a8] sm:$0xff]
        %v404 = vld [vmem:[%s2 + $0x1b0] sm:$0xff]
        %v405 = vld [vmem:[%s2 + $0x1b8] sm:$0xff]
        %v406 = vld [vmem:[%s2 + $0x1c0] sm:$0xff]
        %v407 = vld [vmem:[%s2 + $0x1c8] sm:$0xff]
        %v408 = vld [vmem:[%s2 + $0x1d0] sm:$0xff]
        %v409 = vld [vmem:[%s2 + $0x1d8] sm:$0xff]
        %v410 = vld [vmem:[%s2 + $0x1e0] sm:$0xff]
        %v411 = vld [vmem:[%s2 + $0x1e8] sm:$0xff]
        %v412 = vld [vmem:[%s2 + $0x1f0] sm:$0xff]
        %v413 = vld [vmem:[%s2 + $0x1f8] sm:$0xff]
        %v414 = vld [vmem:[%s3] sm:$0xf]
        %v415 = vpack.c.bf16 %v344, %v344
        %v416 = vpack.c.bf16 %v349, %v349
        %v418 = vlaneseq
        %v419 = vshrl.u32 %v418, 7
        %v420 = vsub.s32 0, %v419
        %v421 = vrot.slane %v414, %v420
        %v422 = vlaneseq
        %v423 = vshrl.u32 %v422, 7
        %v424 = vsub.s32 1, %v423
        %v425 = vrot.slane %v414, %v424
        %v426 = vlaneseq
        %v427 = vshrl.u32 %v426, 7
        %v428 = vsub.s32 2, %v427
        %v429 = vrot.slane %v414, %v428
        %v430 = vlaneseq
        %v431 = vshrl.u32 %v430, 7
        %v432 = vsub.s32 3, %v431
        %v433 = vrot.slane %v414, %v432
        %v502 = vunpack.c.l.b16 %v350
        %v503 = vunpack.c.h.b16 %v350
        %v504 = vunpack.c.l.b16 %v351
        %v505 = vunpack.c.h.b16 %v351
        %v506 = vunpack.c.l.b16 %v352
        %v507 = vunpack.c.h.b16 %v352
        %v508 = vunpack.c.l.b16 %v353
        %v509 = vunpack.c.h.b16 %v353
        %v510 = vunpack.c.l.b16 %v354
        %v511 = vunpack.c.h.b16 %v354
        %v512 = vunpack.c.l.b16 %v355
        %v513 = vunpack.c.h.b16 %v355
        %v514 = vunpack.c.l.b16 %v356
        %v515 = vunpack.c.h.b16 %v356
        %v516 = vunpack.c.l.b16 %v357
        %v517 = vunpack.c.h.b16 %v357
        %v518 = vunpack.c.l.b16 %v358
        %v519 = vunpack.c.h.b16 %v358
        %v520 = vunpack.c.l.b16 %v359
        %v521 = vunpack.c.h.b16 %v359
        %v522 = vunpack.c.l.b16 %v360
        %v523 = vunpack.c.h.b16 %v360
        %v524 = vunpack.c.l.b16 %v361
        %v525 = vunpack.c.h.b16 %v361
        %v526 = vunpack.c.l.b16 %v362
        %v527 = vunpack.c.h.b16 %v362
        %v528 = vunpack.c.l.b16 %v363
        %v529 = vunpack.c.h.b16 %v363
        %v530 = vunpack.c.l.b16 %v364
        %v531 = vunpack.c.h.b16 %v364
        %v532 = vunpack.c.l.b16 %v365
        %v533 = vunpack.c.h.b16 %v365
        %v534 = vunpack.c.l.b16 %v366
        %v535 = vunpack.c.h.b16 %v366
        %v536 = vunpack.c.l.b16 %v367
        %v537 = vunpack.c.h.b16 %v367
        %v538 = vunpack.c.l.b16 %v368
        %v539 = vunpack.c.h.b16 %v368
        %v540 = vunpack.c.l.b16 %v369
        %v541 = vunpack.c.h.b16 %v369
        %v542 = vunpack.c.l.b16 %v370
        %v543 = vunpack.c.h.b16 %v370
        %v544 = vunpack.c.l.b16 %v371
        %v545 = vunpack.c.h.b16 %v371
        %v546 = vunpack.c.l.b16 %v372
        %v547 = vunpack.c.h.b16 %v372
        %v548 = vunpack.c.l.b16 %v373
        %v549 = vunpack.c.h.b16 %v373
        %v550 = vunpack.c.l.b16 %v374
        %v551 = vunpack.c.h.b16 %v374
        %v552 = vunpack.c.l.b16 %v375
        %v553 = vunpack.c.h.b16 %v375
        %v554 = vunpack.c.l.b16 %v376
        %v555 = vunpack.c.h.b16 %v376
        %v556 = vunpack.c.l.b16 %v377
        %v557 = vunpack.c.h.b16 %v377
        %v558 = vunpack.c.l.b16 %v378
        %v559 = vunpack.c.h.b16 %v378
        %v560 = vunpack.c.l.b16 %v379
        %v561 = vunpack.c.h.b16 %v379
        %v562 = vunpack.c.l.b16 %v380
        %v563 = vunpack.c.h.b16 %v380
        %v564 = vunpack.c.l.b16 %v381
        %v565 = vunpack.c.h.b16 %v381
        %v566 = vunpack.c.l.b16 %v382
        %v567 = vunpack.c.h.b16 %v382
        %v568 = vunpack.c.l.b16 %v383
        %v569 = vunpack.c.h.b16 %v383
        %v570 = vunpack.c.l.b16 %v384
        %v571 = vunpack.c.h.b16 %v384
        %v572 = vunpack.c.l.b16 %v385
        %v573 = vunpack.c.h.b16 %v385
        %v574 = vunpack.c.l.b16 %v386
        %v575 = vunpack.c.h.b16 %v386
        %v576 = vunpack.c.l.b16 %v387
        %v577 = vunpack.c.h.b16 %v387
        %v578 = vunpack.c.l.b16 %v388
        %v579 = vunpack.c.h.b16 %v388
        %v580 = vunpack.c.l.b16 %v389
        %v581 = vunpack.c.h.b16 %v389
        %v582 = vunpack.c.l.b16 %v390
        %v583 = vunpack.c.h.b16 %v390
        %v584 = vunpack.c.l.b16 %v391
        %v585 = vunpack.c.h.b16 %v391
        %v586 = vunpack.c.l.b16 %v392
        %v587 = vunpack.c.h.b16 %v392
        %v588 = vunpack.c.l.b16 %v393
        %v589 = vunpack.c.h.b16 %v393
        %v590 = vunpack.c.l.b16 %v394
        %v591 = vunpack.c.h.b16 %v394
        %v592 = vunpack.c.l.b16 %v395
        %v593 = vunpack.c.h.b16 %v395
        %v594 = vunpack.c.l.b16 %v396
        %v595 = vunpack.c.h.b16 %v396
        %v596 = vunpack.c.l.b16 %v397
        %v597 = vunpack.c.h.b16 %v397
        %v598 = vunpack.c.l.b16 %v398
        %v599 = vunpack.c.h.b16 %v398
        %v600 = vunpack.c.l.b16 %v399
        %v601 = vunpack.c.h.b16 %v399
        %v602 = vunpack.c.l.b16 %v400
        %v603 = vunpack.c.h.b16 %v400
        %v604 = vunpack.c.l.b16 %v401
        %v605 = vunpack.c.h.b16 %v401
        %v606 = vunpack.c.l.b16 %v402
        %v607 = vunpack.c.h.b16 %v402
        %v608 = vunpack.c.l.b16 %v403
        %v609 = vunpack.c.h.b16 %v403
        %v610 = vunpack.c.l.b16 %v404
        %v611 = vunpack.c.h.b16 %v404
        %v612 = vunpack.c.l.b16 %v405
        %v613 = vunpack.c.h.b16 %v405
        %v614 = vunpack.c.l.b16 %v406
        %v615 = vunpack.c.h.b16 %v406
        %v616 = vunpack.c.l.b16 %v407
        %v617 = vunpack.c.h.b16 %v407
        %v618 = vunpack.c.l.b16 %v408
        %v619 = vunpack.c.h.b16 %v408
        %v620 = vunpack.c.l.b16 %v409
        %v621 = vunpack.c.h.b16 %v409
        %v622 = vunpack.c.l.b16 %v410
        %v623 = vunpack.c.h.b16 %v410
        %v624 = vunpack.c.l.b16 %v411
        %v625 = vunpack.c.h.b16 %v411
        %v626 = vunpack.c.l.b16 %v412
        %v627 = vunpack.c.h.b16 %v412
        %v628 = vunpack.c.l.b16 %v413
        %v629 = vunpack.c.h.b16 %v413
        %v630 = vpack.c.b16 %v506, %v502
        %v631 = vpack.c.b16 %v507, %v503
        %v632 = vpack.c.b16 %v508, %v504
        %v633 = vpack.c.b16 %v509, %v505
        %v634 = vpack.c.b16 %v514, %v510
        %v635 = vpack.c.b16 %v515, %v511
        %v636 = vpack.c.b16 %v516, %v512
        %v637 = vpack.c.b16 %v517, %v513
        %v638 = vpack.c.b16 %v522, %v518
        %v639 = vpack.c.b16 %v523, %v519
        %v640 = vpack.c.b16 %v524, %v520
        %v641 = vpack.c.b16 %v525, %v521
        %v642 = vpack.c.b16 %v530, %v526
        %v643 = vpack.c.b16 %v531, %v527
        %v644 = vpack.c.b16 %v532, %v528
        %v645 = vpack.c.b16 %v533, %v529
        %v646 = vpack.c.b16 %v538, %v534
        %v647 = vpack.c.b16 %v539, %v535
        %v648 = vpack.c.b16 %v540, %v536
        %v649 = vpack.c.b16 %v541, %v537
        %v650 = vpack.c.b16 %v546, %v542
        %v651 = vpack.c.b16 %v547, %v543
        %v652 = vpack.c.b16 %v548, %v544
        %v653 = vpack.c.b16 %v549, %v545
        %v654 = vpack.c.b16 %v554, %v550
        %v655 = vpack.c.b16 %v555, %v551
        %v656 = vpack.c.b16 %v556, %v552
        %v657 = vpack.c.b16 %v557, %v553
        %v658 = vpack.c.b16 %v562, %v558
        %v659 = vpack.c.b16 %v563, %v559
        %v660 = vpack.c.b16 %v564, %v560
        %v661 = vpack.c.b16 %v565, %v561
        %v662 = vpack.c.b16 %v570, %v566
        %v663 = vpack.c.b16 %v571, %v567
        %v664 = vpack.c.b16 %v572, %v568
        %v665 = vpack.c.b16 %v573, %v569
        %v666 = vpack.c.b16 %v578, %v574
        %v667 = vpack.c.b16 %v579, %v575
        %v668 = vpack.c.b16 %v580, %v576
        %v669 = vpack.c.b16 %v581, %v577
        %v670 = vpack.c.b16 %v586, %v582
        %v671 = vpack.c.b16 %v587, %v583
        %v672 = vpack.c.b16 %v588, %v584
        %v673 = vpack.c.b16 %v589, %v585
        %v674 = vpack.c.b16 %v594, %v590
        %v675 = vpack.c.b16 %v595, %v591
        %v676 = vpack.c.b16 %v596, %v592
        %v677 = vpack.c.b16 %v597, %v593
        %v678 = vpack.c.b16 %v602, %v598
        %v679 = vpack.c.b16 %v603, %v599
        %v680 = vpack.c.b16 %v604, %v600
        %v681 = vpack.c.b16 %v605, %v601
        %v682 = vpack.c.b16 %v610, %v606
        %v683 = vpack.c.b16 %v611, %v607
        %v684 = vpack.c.b16 %v612, %v608
        %v685 = vpack.c.b16 %v613, %v609
        %v686 = vpack.c.b16 %v618, %v614
        %v687 = vpack.c.b16 %v619, %v615
        %v688 = vpack.c.b16 %v620, %v616
        %v689 = vpack.c.b16 %v621, %v617
        %v690 = vpack.c.b16 %v626, %v622
        %v691 = vpack.c.b16 %v627, %v623
        %v692 = vpack.c.b16 %v628, %v624
        %v693 = vpack.c.b16 %v629, %v625
        %758 = vmatprep.subr.bf16.mxu0 %v631
        %759 = vmatpush1.bf16.msra.mxu0 %v630
        %760 = vmatprep.subr.bf16.mxu0 %v635
        %761 = vmatpush1.bf16.msra.mxu0 %v634
        %762 = vmatprep.subr.bf16.mxu0 %v639
        %763 = vmatpush1.bf16.msra.mxu0 %v638
        %764 = vmatprep.subr.bf16.mxu0 %v643
        %765 = vmatpush1.bf16.msra.mxu0 %v642
        %766 = vmatprep.subr.bf16.mxu0 %v647
        %767 = vmatpush1.bf16.msra.mxu0 %v646
        %768 = vmatprep.subr.bf16.mxu0 %v651
        %769 = vmatpush1.bf16.msra.mxu0 %v650
        %770 = vmatprep.subr.bf16.mxu0 %v655
        %771 = vmatpush1.bf16.msra.mxu0 %v654
        %772 = vmatprep.subr.bf16.mxu0 %v659
        %773 = vmatpush1.bf16.msra.mxu0 %v658
        %774 = vmatprep.subr.bf16.mxu0 %v663
        %775 = vmatpush1.bf16.msra.mxu0 %v662
        %776 = vmatprep.subr.bf16.mxu0 %v667
        %777 = vmatpush1.bf16.msra.mxu0 %v666
        %778 = vmatprep.subr.bf16.mxu0 %v671
        %779 = vmatpush1.bf16.msra.mxu0 %v670
        %780 = vmatprep.subr.bf16.mxu0 %v675
        %781 = vmatpush1.bf16.msra.mxu0 %v674
        %782 = vmatprep.subr.bf16.mxu0 %v679
        %783 = vmatpush1.bf16.msra.mxu0 %v678
        %784 = vmatprep.subr.bf16.mxu0 %v683
        %785 = vmatpush1.bf16.msra.mxu0 %v682
        %786 = vmatprep.subr.bf16.mxu0 %v687
        %787 = vmatpush1.bf16.msra.mxu0 %v686
        %788 = vmatprep.subr.bf16.mxu0 %v691
        %789 = vmatpush1.bf16.msra.mxu0 %v690
        %790 = vmatprep.mubr.bf16.mxu0 %v416
        %791 = vmatmul.mubr.bf16.gmra.mrb[0].mxu0 %v415
        %v792 = vpop.f32.mrb[0].mxu0
        %v793 = vadd.f32 %v421, %v792
        %v794 = vpop.f32.mrb[0].mxu0
        %v795 = vadd.f32 %v425, %v794
        %v796 = vpop.f32.mrb[0].mxu0
        %v797 = vpop.f32.mrb[0].mxu0
        %798 = vdwg.mxu0
        %799 = vmatprep.subr.bf16.mxu0 %v633
        %800 = vmatpush1.bf16.msra.mxu0 %v632
        %801 = vmatprep.subr.bf16.mxu0 %v637
        %802 = vmatpush1.bf16.msra.mxu0 %v636
        %803 = vmatprep.subr.bf16.mxu0 %v641
        %804 = vmatpush1.bf16.msra.mxu0 %v640
        %805 = vmatprep.subr.bf16.mxu0 %v645
        %806 = vmatpush1.bf16.msra.mxu0 %v644
        %807 = vmatprep.subr.bf16.mxu0 %v649
        %808 = vmatpush1.bf16.msra.mxu0 %v648
        %809 = vmatprep.subr.bf16.mxu0 %v653
        %810 = vmatpush1.bf16.msra.mxu0 %v652
        %811 = vmatprep.subr.bf16.mxu0 %v657
        %812 = vmatpush1.bf16.msra.mxu0 %v656
        %813 = vmatprep.subr.bf16.mxu0 %v661
        %814 = vmatpush1.bf16.msra.mxu0 %v660
        %815 = vmatprep.subr.bf16.mxu0 %v665
        %816 = vmatpush1.bf16.msra.mxu0 %v664
        %817 = vmatprep.subr.bf16.mxu0 %v669
        %818 = vmatpush1.bf16.msra.mxu0 %v668
        %819 = vmatprep.subr.bf16.mxu0 %v673
        %820 = vmatpush1.bf16.msra.mxu0 %v672
        %821 = vmatprep.subr.bf16.mxu0 %v677
        %822 = vmatpush1.bf16.msra.mxu0 %v676
        %823 = vmatprep.subr.bf16.mxu0 %v681
        %824 = vmatpush1.bf16.msra.mxu0 %v680
        %825 = vmatprep.subr.bf16.mxu0 %v685
        %826 = vmatpush1.bf16.msra.mxu0 %v684
        %827 = vmatprep.subr.bf16.mxu0 %v689
        %828 = vmatpush1.bf16.msra.mxu0 %v688
        %829 = vmatprep.subr.bf16.mxu0 %v693
        %830 = vmatpush1.bf16.msra.mxu0 %v692
        %831 = vmatprep.mubr.bf16.mxu0 %v416
        %832 = vmatmul.mubr.bf16.gmra.mrb[0].mxu0 %v415
        %v833 = vpop.f32.mrb[0].mxu0
        %v834 = vadd.f32 %v429, %v833
        %v835 = vpop.f32.mrb[0].mxu0
        %v836 = vadd.f32 %v433, %v835
        %v837 = vpop.f32.mrb[0].mxu0
        %v838 = vpop.f32.mrb[0].mxu0
        %839 = vdwg.mxu0
        %v840 = vxor.u32 %v793, 2147483648
        %v841 = vmul.f32 %v840, 1.442695
        %v842 = vpow.pop %v841
        %v843 = vadd.f32 %v842, 1.0
        %v844 = vrcp.pop %v843
        %v845 = vmul.f32 1.0, %v844
        %v846 = vxor.u32 %v795, 2147483648
        %v847 = vmul.f32 %v846, 1.442695
        %v848 = vpow.pop %v847
        %v849 = vadd.f32 %v848, 1.0
        %v850 = vrcp.pop %v849
        %v851 = vmul.f32 1.0, %v850
        %v852 = vmul.f32 %v845, %v836
        %v853 = vadd.f32 %v834, %v852
        %v854 = vtanh.pop %v853
        %v855 = vsub.f32 1.0, %v851
        %v856 = vmul.f32 %v855, %v854
        %v857 = vmul.f32 %v851, %v349
        %v858 = vadd.f32 %v856, %v857
        %859 = vst [vmem:[#allocation2] sm:$0x3] %v858
        %v860 = vpack.c.bf16 %v858, %v858
        %v861 = vld [vmem:[%s4] sm:$0xf]
        %v862 = vld [vmem:[%s4 + $0x4] sm:$0xf]
        %v863 = vld [vmem:[%s4 + $0x8] sm:$0xf]
        %v864 = vld [vmem:[%s4 + $0xc] sm:$0xf]
        %v865 = vld [vmem:[%s4 + $0x10] sm:$0xf]
        %v866 = vld [vmem:[%s4 + $0x14] sm:$0xf]
        %v867 = vld [vmem:[%s4 + $0x18] sm:$0xf]
        %v868 = vld [vmem:[%s4 + $0x1c] sm:$0xf]
        %v869 = vld [vmem:[%s4 + $0x20] sm:$0xf]
        %v870 = vld [vmem:[%s4 + $0x24] sm:$0xf]
        %v871 = vld [vmem:[%s4 + $0x28] sm:$0xf]
        %v872 = vld [vmem:[%s4 + $0x2c] sm:$0xf]
        %v873 = vld [vmem:[%s4 + $0x30] sm:$0xf]
        %v874 = vld [vmem:[%s4 + $0x34] sm:$0xf]
        %v875 = vld [vmem:[%s4 + $0x38] sm:$0xf]
        %v876 = vld [vmem:[%s4 + $0x3c] sm:$0xf]
        %v877 = vld [vmem:[%s5] sm:$0x1]
        %v879 = vlaneseq
        %v880 = vshrl.u32 %v879, 7
        %v881 = vsub.s32 0, %v880
        %v882 = vrot.slane %v877, %v881
        %v900 = vunpack.c.l.b16 %v861
        %v901 = vunpack.c.l.b16 %v862
        %v902 = vunpack.c.l.b16 %v863
        %v903 = vunpack.c.l.b16 %v864
        %v904 = vunpack.c.l.b16 %v865
        %v905 = vunpack.c.l.b16 %v866
        %v906 = vunpack.c.l.b16 %v867
        %v907 = vunpack.c.l.b16 %v868
        %v908 = vunpack.c.l.b16 %v869
        %v909 = vunpack.c.l.b16 %v870
        %v910 = vunpack.c.l.b16 %v871
        %v911 = vunpack.c.l.b16 %v872
        %v912 = vunpack.c.l.b16 %v873
        %v913 = vunpack.c.l.b16 %v874
        %v914 = vunpack.c.l.b16 %v875
        %v915 = vunpack.c.l.b16 %v876
        %v916 = vpack.c.b16 %v901, %v900
        %v917 = vpack.c.b16 %v903, %v902
        %v918 = vpack.c.b16 %v905, %v904
        %v919 = vpack.c.b16 %v907, %v906
        %v920 = vpack.c.b16 %v909, %v908
        %v921 = vpack.c.b16 %v911, %v910
        %v922 = vpack.c.b16 %v913, %v912
        %v923 = vpack.c.b16 %v915, %v914
        %932 = vmatprep.subr.bf16.mxu0 0
        %933 = vmatpush1.bf16.msra.mxu0 %v916
        %934 = vmatprep.subr.bf16.mxu0 0
        %935 = vmatpush1.bf16.msra.mxu0 %v917
        %936 = vmatprep.subr.bf16.mxu0 0
        %937 = vmatpush1.bf16.msra.mxu0 %v918
        %938 = vmatprep.subr.bf16.mxu0 0
        %939 = vmatpush1.bf16.msra.mxu0 %v919
        %940 = vmatprep.subr.bf16.mxu0 0
        %941 = vmatpush1.bf16.msra.mxu0 %v920
        %942 = vmatprep.subr.bf16.mxu0 0
        %943 = vmatpush1.bf16.msra.mxu0 %v921
        %944 = vmatprep.subr.bf16.mxu0 0
        %945 = vmatpush1.bf16.msra.mxu0 %v922
        %946 = vmatprep.subr.bf16.mxu0 0
        %947 = vmatpush1.bf16.msra.mxu0 %v923
        %948 = vmatprep.subr.bf16.mxu0 0
        %949 = vmatpush1.bf16.msra.mxu0 0
        %950 = vmatprep.subr.bf16.mxu0 0
        %951 = vmatpush1.bf16.msra.mxu0 0
        %952 = vmatprep.subr.bf16.mxu0 0
        %953 = vmatpush1.bf16.msra.mxu0 0
        %954 = vmatprep.subr.bf16.mxu0 0
        %955 = vmatpush1.bf16.msra.mxu0 0
        %956 = vmatprep.subr.bf16.mxu0 0
        %957 = vmatpush1.bf16.msra.mxu0 0
        %958 = vmatprep.subr.bf16.mxu0 0
        %959 = vmatpush1.bf16.msra.mxu0 0
        %960 = vmatprep.subr.bf16.mxu0 0
        %961 = vmatpush1.bf16.msra.mxu0 0
        %962 = vmatprep.subr.bf16.mxu0 0
        %963 = vmatpush1.bf16.msra.mxu0 0
        %964 = vmatprep.mubr.bf16.mxu0 0
        %965 = vmatmul.mubr.bf16.gmra.mrb[0].mxu0 %v860
        %v966 = vpop.f32.mrb[0].mxu0
        %v967 = vadd.f32 %v882, %v966
        %v968 = vpop.f32.mrb[0].mxu0
        %v969 = vpop.f32.mrb[0].mxu0
        %v970 = vpop.f32.mrb[0].mxu0
        %971 = vdwg.mxu0
        %vm972 = vcmask 1041408
        %v973 = vsel %vm972, %v967, -inf
        %974 = vmax.xlane.f32.xlu0 %v973
        %v975 = vpop.xlane.xlu0 %974
        %v976 = vsub.f32 %v967, %v975
        %v977 = vmul.f32 %v976, 1.442695
        %v978 = vpow.pop %v977
        %v979 = vsel %vm972, %v978, 0.0
        %980 = vadd.xlane.f32.xlu0 %v979
        %v981 = vpop.xlane.xlu0 %980
        %v982 = vlog2.pop %v981
        %v983 = vmul.f32 %v982, 0.6931472
        %v984 = vsub.f32 %v976, %v983
        %985 = vst [vmem:[%s229] sm:$0x3] %v984
        %v986 = vlaneseq
        %v987 = vand.u32 %v986, 127
        %v988 = vsel %vm972, %v984, -inf
        %989 = vmax.xlane.f32.xlu0 %v988
        %v990 = vpop.xlane.xlu0 %989
        %vm991 = vcmp.eq.f32.partialorder %v984, %v990
        %v992 = vsel %vm991, %v987, 128
        %v993 = vsel %vm972, %v992, 2147483647
        %v994 = vand.u32 %v993, 65535
        %v995 = vshra.s32 %v993, 16
        %v996 = vcvt.s32.f32 %v994
        %v997 = vcvt.s32.f32 %v995
        %998 = vmin.xlane.f32.xlu0 %v997
        %v999 = vpop.xlane.xlu0 %998
        %vm1000 = vcmp.eq.f32.partialorder %v997, %v999
        %v1001 = vsel %vm1000, %v996, inf
        %1002 = vmin.xlane.f32.xlu0 %v1001
        %v1003 = vpop.xlane.xlu0 %1002
        %v1004 = vcvt.f32.s32 %v1003
        %v1005 = vcvt.f32.s32 %v999
        %v1006 = vshll.u32 %v1005, 16
        %v1007 = vadd.s32 %v1006, %v1004
        %vm1008 = vcmp.eq.s32.totalorder %v987, %v1007
        %v1009 = vsel %vm1008, 1, 0
        %v1010 = vcvt.s32.f32 %v1009
        %1011 = vst [vmem:[#allocation3] sm:$0x3] %v1010
        %s1012 = sand.u32 %s154, 1
        %s1013 = scalar_lea.sflag [#allocation5], %s1012
        %s1014 = sand.u32 %s154, 1
        %s1015 = smul.addr %s1014, 2
        %s1016 = scalar_lea.vmem [#allocation4], %s1015
        // Predicated region
        $region49: #{seq2seq_forward.3} parent=43 // pred_check
          %p1017 = pneg %p164
        $region50: #{seq2seq_forward.3} parent=43 // pred_check_branch
          %1019 = sbr.rel (%p1017) target = $region52
        $region51: #{seq2seq_forward.3} parent=43 // pred_region
          %s1021 = ssub.s32 32, 32
          %1022 = vsyncadd %s1013, %s1021
          %s1023 = smul.addr %s20, 32
          %s1024 = scalar_lea.hbm %s6, %s1023
          %s1026 = sshll.u32 %s1016, 4
          %s1027 = int_to_ptr.vmem [resolvable:$true] %s1026
          %1029 = dma.vmem_to_hbm [thread:$0]  %s1027, 32, %s1024, %s1013
        $region52: #{seq2seq_forward.3} parent=43 // pred_fallthru
          _
      $region44: #{seq2seq_forward.3} parent=5 // pred_fallthru
        _
      %p1030 = scmp.le.s32.totalorder 2, %s15
      // Predicated region
      $region53: #{seq2seq_forward.3} parent=5 // pred_check
        %p1031 = pneg %p1030
      $region54: #{seq2seq_forward.3} parent=5 // pred_check_branch
        %1033 = sbr.rel (%p1031) target = $region56
      $region55: #{seq2seq_forward.3} parent=5 // pred_region
        %s1034 = ssub.s32 %s15, 2
        // Predicated region
        $region57: #{seq2seq_forward.3} parent=55 // pred_check
          %p1035 = pneg %p170
        $region58: #{seq2seq_forward.3} parent=55 // pred_check_branch
          %1037 = sbr.rel (%p1035) target = $region60
        $region59: #{seq2seq_forward.3} parent=55 // pred_region
          %s1038 = sand.u32 %s155, 1
          %s1039 = scalar_lea.sflag [#allocation5], %s1038
          %s1040 = sand.u32 %s155, 1
          %s1041 = smul.addr %s1040, 2
          %s1042 = scalar_lea.vmem [#allocation4], %s1041
          %1043 = dma.done %s1039, 32
        $region60: #{seq2seq_forward.3} parent=55 // pred_fallthru
          _
      $region56: #{seq2seq_forward.3} parent=5 // pred_fallthru
        _
    $region6: #{seq2seq_forward.3} parent=1 // loop_footer
      %s19 = sadd.s32 1, %s15
    $region7: #{seq2seq_forward.3} parent=1 // loop_footer_branch
      %14 = sbr.rel target = $region3
    $region8: #{seq2seq_forward.3} parent=1 // loop_exit
      _
    %1044 = vsyncpa [#allocation5], 1
    %s1045 = scalar_lea.sflag [#allocation5], 1
    %1046 = vsyncpa %s1045, 1

</llo_original>
